<compile_context>
chip_gen: v7x
topology: tpu7x:2x2x1
jax: 0.10.0
libtpu: 0.0.40
codegen_flags: <defaults>
</compile_context>

<pallas_src>
import math

import jax
import jax.numpy as jnp
from jax.experimental import pallas as pl
from jax.experimental.pallas import tpu as pltpu

# Module constants (from RAM_catch.py)
IM_SZ = 24
SCALE = 3
GW = 6                        # glimpse width
STD = 0.25
HW = GW // 2                  # 3
PADSZ = 2 ** (SCALE - 1) * HW     # 12
PATCH = 2 * PADSZ                 # 24 (extracted patch side)
HID = 256                     # LSTM hidden size
MISC_W = 128                  # lane-dense packed small-output slab width
AUX_W = 128                   # lane-dense packed small-input slab width


def _round_up(n, m):
    return ((n + m - 1) // m) * m


def _sigmoid(x):
    # EUP tanh instead of VALU divide: sigmoid(x) = 0.5*(tanh(x/2)+1)
    return 0.5 * (jnp.tanh(0.5 * x) + 1.0)


def ram_kernel(ro_ref, aux_ref, h0_ref, c0_ref,
               w_ro_ref, b_ro_ref, w_lc_ref, b_lc_ref,
               w_g_ref, b_g_ref, w_lstm_ref, b_lstm_ref,
               w_head_ref, b_head_ref,
               misc_ref, h_new_ref, c_new_ref):
    f32 = jnp.float32
    bf16 = jnp.bfloat16

    # packed per-row input slab: cols 0:2 = l, 2:4 = eps, 4:7 = gumbel noise
    aux = aux_ref[...]
    l = aux[:, 0:2]
    eps = aux[:, 2:4]
    gum = aux[:, 4:7]

    # ---- GLIMPSE encoder (bf16 MXU operands, f32 accumulate) ----
    hg = jnp.maximum(
        jnp.dot(ro_ref[...].astype(bf16), w_ro_ref[...],
                preferred_element_type=f32) + b_ro_ref[...], 0.0)
    # K=2 "matmul" as VPU broadcast-FMA (keeps the MXU for the real matmuls)
    hl = jnp.maximum(
        l[:, 0:1] * w_lc_ref[0:1, :] + l[:, 1:2] * w_lc_ref[1:2, :]
        + b_lc_ref[...], 0.0)
    # g = relu(hg @ w_hg + hl @ w_hl + b): static row-slices of the fused
    # (256,256) weight; no lane-concat of activations.
    g = jnp.maximum(
        jnp.dot(hg.astype(bf16), w_g_ref[0:128, :], preferred_element_type=f32)
        + jnp.dot(hl.astype(bf16), w_g_ref[128:256, :], preferred_element_type=f32)
        + b_g_ref[...], 0.0)

    # ---- CORE: LSTMCell (fused weight sliced, gate order i,f,g,o; f32 gates) ----
    gates = (jnp.dot(g.astype(bf16), w_lstm_ref[0:HID, :],
                     preferred_element_type=f32)
             + jnp.dot(h0_ref[...].astype(bf16), w_lstm_ref[HID:2 * HID, :],
                       preferred_element_type=f32)
             + b_lstm_ref[...])                                     # (BB, 1024)
    i_g = _sigmoid(gates[:, 0 * HID:1 * HID])
    f_g = _sigmoid(gates[:, 1 * HID:2 * HID])
    g_g = jnp.tanh(gates[:, 2 * HID:3 * HID])
    o_g = _sigmoid(gates[:, 3 * HID:4 * HID])
    c_new = f_g * c0_ref[...] + i_g * g_g
    h_new = o_g * jnp.tanh(c_new)
    h_new_ref[...] = h_new
    c_new_ref[...] = c_new

    # ---- fused LOCATION / ACTION head (N padded to 8) ----
    head = (jnp.dot(h_new.astype(bf16), w_head_ref[...],
                    preferred_element_type=f32) + b_head_ref[...])  # (BB, 8)
    l_mu = head[:, 0:2]
    logits = head[:, 2:5]

    # LOCATION: Normal(mu, std) sample + log_prob + tanh ((l_samp-mu)/std == eps)
    l_samp = l_mu + STD * eps
    logpi_l = (-0.5 * eps * eps
               - math.log(STD) - 0.5 * math.log(2.0 * math.pi))
    l_new = jnp.tanh(l_samp)

    # ACTION: softmax, Categorical sample (Gumbel-max), log_prob
    m = jnp.max(logits, axis=1, keepdims=True)
    logp = logits - m - jnp.log(jnp.sum(jnp.exp(logits - m), axis=1, keepdims=True))
    zz = logp + gum
    zmax = jnp.max(zz, axis=1, keepdims=True)
    iota = jax.lax.broadcasted_iota(jnp.int32, zz.shape, 1)
    a = jnp.min(jnp.where(zz >= zmax, iota, zz.shape[1]), axis=1, keepdims=True)
    onehot = (iota == a)
    logpi_a = jnp.sum(jnp.where(onehot, logp, 0.0), axis=1, keepdims=True)
    a_m1 = (a - 1).astype(f32)                                      # actions {-1,0,1}

    # ---- single unmasked lane-dense packed output store ----
    # cols: 0 = a-1, 1 = logpi_a, 2:4 = logpi_l, 4:6 = new l, rest = 0
    pad = jnp.zeros((a_m1.shape[0], MISC_W - 6), f32)
    misc_ref[...] = jnp.concatenate([a_m1, logpi_a, logpi_l, l_new, pad], axis=1)


# ----------------------- plain-JAX glue -----------------------

def _maxpool_flat(p, k):
    # p: (B, C, S, S) -> (B, C*(S//k)**2); matches F.max_pool2d(...).view(B,-1)
    B, C, S, _ = p.shape
    n = S // k
    return p.reshape(B, C, n, k, n, k).max(axis=(3, 5)).reshape(B, C * n * n)


def retina_pooled(x, l):
    """Replicate-pad, crop a 24x24 patch at l per batch, 3-scale max-pool, flatten."""
    B, C, H, W = x.shape
    x_pad = jnp.pad(x, ((0, 0), (0, 0), (PADSZ, PADSZ), (PADSZ, PADSZ)), mode='edge')
    l_int = (IM_SZ * (l + 1.0) / 2.0).astype(jnp.int32)   # trunc, matches torch IntTensor

    def extract(xp_b, lo):
        return jax.lax.dynamic_slice(xp_b, (0, lo[0], lo[1]), (C, PATCH, PATCH))

    patch = jax.vmap(extract)(x_pad, l_int)               # (B, C, 24, 24)
    ro = jnp.concatenate([
        _maxpool_flat(patch, 4),                          # full patch,   k=4
        _maxpool_flat(patch[:, :, 6:18, 6:18], 2),        # center 12x12, k=2
        _maxpool_flat(patch[:, :, 9:15, 9:15], 1),        # center 6x6,   k=1
    ], axis=1)                                            # (B, 3*C*36)
    return ro


def init_params(key, channel=1):
    def lin(k, fan_in, fan_out):
        bound = 1.0 / math.sqrt(fan_in)
        kw, kb = jax.random.split(k)
        w = jax.random.uniform(kw, (fan_in, fan_out), jnp.float32, -bound, bound)
        b = jax.random.uniform(kb, (1, fan_out), jnp.float32, -bound, bound)
        return w, b

    ks = jax.random.split(key, 8)
    p = {}
    p['w_ro'], p['b_ro'] = lin(ks[0], SCALE * GW * GW * channel, 128)
    p['w_lc'], p['b_lc'] = lin(ks[1], 2, 128)
    p['w_hg'], p['b_hg'] = lin(ks[2], 128, HID)
    p['w_hl'], p['b_hl'] = lin(ks[3], 128, HID)
    p['w_ih'], p['b_ih'] = lin(ks[4], HID, 4 * HID)       # LSTMCell input weights
    p['w_hh'], p['b_hh'] = lin(ks[5], HID, 4 * HID)       # LSTMCell hidden weights
    p['w_loc'], p['b_loc'] = lin(ks[6], HID, 2)
    p['w_act'], p['b_act'] = lin(ks[7], HID, 3)
    return p


def fuse_params(p, channel=1):
    """One-time weight fusion/padding/bf16 cast (done outside the jitted step)."""
    bf16 = jnp.bfloat16
    ro_in = SCALE * GW * GW * channel                     # 108 for C=1
    ro_pad = ((ro_in + 127) // 128) * 128                 # 128
    f = {}
    f['w_ro'] = jnp.pad(p['w_ro'], ((0, ro_pad - ro_in), (0, 0))).astype(bf16)  # (128,128)
    f['b_ro'] = p['b_ro']
    f['w_lc'] = p['w_lc']                                                       # (2, 128) f32 (VPU)
    f['b_lc'] = p['b_lc']
    f['w_g'] = jnp.concatenate([p['w_hg'], p['w_hl']], axis=0).astype(bf16)     # (256, 256)
    f['b_g'] = p['b_hg'] + p['b_hl']
    f['w_lstm'] = jnp.concatenate([p['w_ih'], p['w_hh']], axis=0).astype(bf16)  # (512, 1024)
    f['b_lstm'] = p['b_ih'] + p['b_hh']
    f['w_head'] = jnp.concatenate(
        [p['w_loc'], p['w_act'], jnp.zeros((HID, 3), jnp.float32)],
        axis=1).astype(bf16)                                                    # (256, 8)
    f['b_head'] = jnp.concatenate(
        [p['b_loc'], p['b_act'], jnp.zeros((1, 3), jnp.float32)], axis=1)       # (1, 8)
    return f


@jax.jit
def model_forward(x, l, h, c, fp, eps, gum):
    B = x.shape[0]
    ro = retina_pooled(x, l)                              # (B, 108*C)
    ro_pad = fp['w_ro'].shape[0]
    ro = jnp.pad(ro, ((0, 0), (0, ro_pad - ro.shape[1])))  # lane-dense (B, 128)

    # one lane-dense per-row input slab: cols 0:2 = l, 2:4 = eps, 4:7 = gum
    aux = jnp.zeros((B, AUX_W), jnp.float32)
    aux = aux.at[:, 0:2].set(l).at[:, 2:4].set(eps).at[:, 4:7].set(gum)

    # batch blocking: pad to sublane multiple of 8; for B>8 keep >=2 grid steps
    # so ("parallel",) shards across both TensorCores on v7x (block cap 512).
    B8 = _round_up(B, 8)
    if B8 <= 8:
        BB = 8
    else:
        BB = min(_round_up((B8 + 1) // 2, 8), 512)
    Bp = _round_up(B8, BB)

    def padb(a):
        return jnp.pad(a, ((0, Bp - B), (0, 0)))

    ro_p, aux_p, h_in, c_in = padb(ro), padb(aux), padb(h), padb(c)

    grid = (Bp // BB,)

    def batch_spec(n_lanes):
        return pl.BlockSpec((BB, n_lanes), lambda i: (i, 0))

    def const_spec(shape):
        return pl.BlockSpec(shape, lambda i: (0, 0))

    in_specs = [
        batch_spec(ro_pad),                               # ro
        batch_spec(AUX_W),                                # packed l/eps/gum
        batch_spec(HID),                                  # h0
        batch_spec(HID),                                  # c0
        const_spec(fp['w_ro'].shape), const_spec(fp['b_ro'].shape),
        const_spec(fp['w_lc'].shape), const_spec(fp['b_lc'].shape),
        const_spec(fp['w_g'].shape), const_spec(fp['b_g'].shape),
        const_spec(fp['w_lstm'].shape), const_spec(fp['b_lstm'].shape),
        const_spec(fp['w_head'].shape), const_spec(fp['b_head'].shape),
    ]
    out_specs = (
        batch_spec(MISC_W),                               # packed small outputs
        batch_spec(HID),                                  # new hidden
        batch_spec(HID),                                  # new cell
    )
    out_shapes = (
        jax.ShapeDtypeStruct((Bp, MISC_W), jnp.float32),
        jax.ShapeDtypeStruct((Bp, HID), jnp.float32),
        jax.ShapeDtypeStruct((Bp, HID), jnp.float32),
    )

    # advisory cost hint so XLA schedules the retina gather around the call
    flops = 2 * Bp * (ro_pad * 128 + 2 * 128 + 2 * 128 * HID
                      + 2 * HID * 4 * HID + HID * 8) + 16 * Bp * HID
    transc = Bp * (5 * HID + 8)
    param_bytes = sum(int(v.size) * v.dtype.itemsize for v in fp.values())
    act_bytes = 4 * Bp * (ro_pad + AUX_W + 4 * HID + MISC_W)
    cost = pl.CostEstimate(flops=flops, transcendentals=transc,
                           bytes_accessed=param_bytes + act_bytes)

    misc, h_new, c_new = pl.pallas_call(
        ram_kernel,
        out_shape=out_shapes,
        grid=grid,
        in_specs=in_specs,
        out_specs=out_specs,
        input_output_aliases={2: 1, 3: 2},   # reuse h0/c0 buffers for h_new/c_new
        compiler_params=pltpu.CompilerParams(
            dimension_semantics=("parallel",)),
        cost_estimate=cost,
    )(ro_p, aux_p, h_in, c_in,
      fp['w_ro'], fp['b_ro'], fp['w_lc'], fp['b_lc'],
      fp['w_g'], fp['b_g'], fp['w_lstm'], fp['b_lstm'],
      fp['w_head'], fp['b_head'])

    a = misc[:B, 0].astype(jnp.int32)                     # already a-1, in {-1,0,1}
    logpi_a = misc[:B, 1]
    logpi_l = misc[:B, 2:4]
    l_new = misc[:B, 4:6]
    return a, logpi_a, logpi_l, l_new, h_new[:B], c_new[:B]


if __name__ == "__main__":
    key = jax.random.PRNGKey(0)
    k_x, k_l, k_p, k_eps, k_gum = jax.random.split(key, 5)

    B, C = 2, 1
    x = jax.random.uniform(k_x, (B, C, IM_SZ, IM_SZ), jnp.float32)
    l0 = jax.random.uniform(k_l, (B, 2), jnp.float32) * 2.0 - 1.0   # MODEL.initialize
    h0 = jnp.zeros((B, HID), jnp.float32)                           # CORE.initialize
    c0 = jnp.zeros((B, HID), jnp.float32)
    params = init_params(k_p, channel=C)
    fparams = fuse_params(params, channel=C)

    # Sampling noise for Normal (location) and Categorical (Gumbel-max, action).
    eps = jax.random.normal(k_eps, (B, 2), jnp.float32)
    gum = jax.random.gumbel(k_gum, (B, 3), jnp.float32)

    a, logpi_a, logpi_l, l_new, h_new, c_new = model_forward(
        x, l0, h0, c0, fparams, eps, gum)
    jax.block_until_ready((a, logpi_a, logpi_l, l_new, h_new, c_new))

    assert a.shape == (B,) and logpi_a.shape == (B,) and logpi_l.shape == (B, 2)
    assert l_new.shape == (B, 2) and h_new.shape == (B, HID) and c_new.shape == (B, HID)
    print("KERNEL_OK")
</pallas_src>

<mosaic_0001>
module attributes {stable_mosaic.version = 11 : i64} {
  func.func @ram_kernel(%arg0: i32, %arg1: memref<8x128xf32, #tpu.memory_space<vmem>>, %arg2: memref<8x128xf32, #tpu.memory_space<vmem>>, %arg3: memref<8x256xf32, #tpu.memory_space<vmem>>, %arg4: memref<8x256xf32, #tpu.memory_space<vmem>>, %arg5: memref<128x128xbf16, #tpu.memory_space<vmem>>, %arg6: memref<1x128xf32, #tpu.memory_space<vmem>>, %arg7: memref<2x128xf32, #tpu.memory_space<vmem>>, %arg8: memref<1x128xf32, #tpu.memory_space<vmem>>, %arg9: memref<256x256xbf16, #tpu.memory_space<vmem>>, %arg10: memref<1x256xf32, #tpu.memory_space<vmem>>, %arg11: memref<512x1024xbf16, #tpu.memory_space<vmem>>, %arg12: memref<1x1024xf32, #tpu.memory_space<vmem>>, %arg13: memref<256x8xbf16, #tpu.memory_space<vmem>>, %arg14: memref<1x8xf32, #tpu.memory_space<vmem>>, %arg15: memref<8x128xf32, #tpu.memory_space<vmem>>, %arg16: memref<8x256xf32, #tpu.memory_space<vmem>>, %arg17: memref<8x256xf32, #tpu.memory_space<vmem>>) attributes {dimension_semantics = [#tpu.dimension_semantics<parallel>], iteration_bounds = array<i64: 1>, scalar_prefetch = 0 : i64, scratch_operands = 0 : i64, tpu.core_type = #tpu.core_type<tc>, window_params = [{transform_indices = @transform_0, window_bounds = array<i64: 8, 128>}, {transform_indices = @transform_1, window_bounds = array<i64: 8, 128>}, {transform_indices = @transform_2, window_bounds = array<i64: 8, 256>}, {transform_indices = @transform_3, window_bounds = array<i64: 8, 256>}, {pipeline_mode = #tpu.pipeline_mode<synchronous>, transform_indices = @transform_4, window_bounds = array<i64: 128, 128>}, {pipeline_mode = #tpu.pipeline_mode<synchronous>, transform_indices = @transform_5, window_bounds = array<i64: 1, 128>}, {pipeline_mode = #tpu.pipeline_mode<synchronous>, transform_indices = @transform_6, window_bounds = array<i64: 2, 128>}, {pipeline_mode = #tpu.pipeline_mode<synchronous>, transform_indices = @transform_7, window_bounds = array<i64: 1, 128>}, {pipeline_mode = #tpu.pipeline_mode<synchronous>, transform_indices = @transform_8, window_bounds = array<i64: 256, 256>}, {pipeline_mode = #tpu.pipeline_mode<synchronous>, transform_indices = @transform_9, window_bounds = array<i64: 1, 256>}, {pipeline_mode = #tpu.pipeline_mode<synchronous>, transform_indices = @transform_10, window_bounds = array<i64: 512, 1024>}, {pipeline_mode = #tpu.pipeline_mode<synchronous>, transform_indices = @transform_11, window_bounds = array<i64: 1, 1024>}, {pipeline_mode = #tpu.pipeline_mode<synchronous>, transform_indices = @transform_12, window_bounds = array<i64: 256, 8>}, {pipeline_mode = #tpu.pipeline_mode<synchronous>, transform_indices = @transform_13, window_bounds = array<i64: 1, 8>}, {transform_indices = @transform_14, window_bounds = array<i64: 8, 128>}, {transform_indices = @transform_15, window_bounds = array<i64: 8, 256>}, {transform_indices = @transform_16, window_bounds = array<i64: 8, 256>}]} {
    %c0 = arith.constant 0 : index
    %c0_0 = arith.constant 0 : index
    %0 = vector.load %arg2[%c0, %c0_0] : memref<8x128xf32, #tpu.memory_space<vmem>>, vector<8x128xf32>
    %1 = vector.extract_strided_slice %0 {offsets = [0, 0], sizes = [8, 2], strides = [1, 1]} : vector<8x128xf32> to vector<8x2xf32>
    %2 = vector.extract_strided_slice %0 {offsets = [0, 2], sizes = [8, 2], strides = [1, 1]} : vector<8x128xf32> to vector<8x2xf32>
    %3 = vector.extract_strided_slice %0 {offsets = [0, 4], sizes = [8, 3], strides = [1, 1]} : vector<8x128xf32> to vector<8x3xf32>
    %c0_1 = arith.constant 0 : index
    %c0_2 = arith.constant 0 : index
    %4 = vector.load %arg1[%c0_1, %c0_2] : memref<8x128xf32, #tpu.memory_space<vmem>>, vector<8x128xf32>
    %5 = arith.truncf %4 : vector<8x128xf32> to vector<8x128xbf16>
    %c0_3 = arith.constant 0 : index
    %c0_4 = arith.constant 0 : index
    %6 = vector.load %arg5[%c0_3, %c0_4] : memref<128x128xbf16, #tpu.memory_space<vmem>>, vector<128x128xbf16>
    %cst = arith.constant dense<0.000000e+00> : vector<8x128xf32>
    %7 = tpu.matmul %5, %6, %cst {dimension_numbers = #tpu.dot_dimension_numbers<[1], [0], [0], [1], [0, 0, 1, 1], [], []>} : vector<8x128xbf16>, vector<128x128xbf16>, vector<8x128xf32> -> vector<8x128xf32>
    %c0_5 = arith.constant 0 : index
    %c0_6 = arith.constant 0 : index
    %8 = vector.load %arg6[%c0_5, %c0_6] : memref<1x128xf32, #tpu.memory_space<vmem>>, vector<1x128xf32>
    %9 = vector.broadcast %8 : vector<1x128xf32> to vector<8x128xf32>
    %10 = arith.addf %7, %9 : vector<8x128xf32>
    %cst_7 = arith.constant 0.000000e+00 : f32
    %11 = vector.broadcast %cst_7 : f32 to vector<8x128xf32>
    %12 = arith.maximumf %10, %11 : vector<8x128xf32>
    %13 = vector.extract_strided_slice %1 {offsets = [0, 0], sizes = [8, 1], strides = [1, 1]} : vector<8x2xf32> to vector<8x1xf32>
    %c0_8 = arith.constant 0 : index
    %c0_9 = arith.constant 0 : index
    %14 = vector.load %arg7[%c0_8, %c0_9] : memref<2x128xf32, #tpu.memory_space<vmem>>, vector<1x128xf32>
    %15 = vector.broadcast %13 : vector<8x1xf32> to vector<8x128xf32>
    %16 = vector.broadcast %14 : vector<1x128xf32> to vector<8x128xf32>
    %17 = arith.mulf %15, %16 : vector<8x128xf32>
    %18 = vector.extract_strided_slice %1 {offsets = [0, 1], sizes = [8, 1], strides = [1, 1]} : vector<8x2xf32> to vector<8x1xf32>
    %c1 = arith.constant 1 : index
    %c0_10 = arith.constant 0 : index
    %19 = vector.load %arg7[%c1, %c0_10] : memref<2x128xf32, #tpu.memory_space<vmem>>, vector<1x128xf32>
    %20 = vector.broadcast %18 : vector<8x1xf32> to vector<8x128xf32>
    %21 = vector.broadcast %19 : vector<1x128xf32> to vector<8x128xf32>
    %22 = arith.mulf %20, %21 : vector<8x128xf32>
    %23 = arith.addf %17, %22 : vector<8x128xf32>
    %c0_11 = arith.constant 0 : index
    %c0_12 = arith.constant 0 : index
    %24 = vector.load %arg8[%c0_11, %c0_12] : memref<1x128xf32, #tpu.memory_space<vmem>>, vector<1x128xf32>
    %25 = vector.broadcast %24 : vector<1x128xf32> to vector<8x128xf32>
    %26 = arith.addf %23, %25 : vector<8x128xf32>
    %cst_13 = arith.constant 0.000000e+00 : f32
    %27 = vector.broadcast %cst_13 : f32 to vector<8x128xf32>
    %28 = arith.maximumf %26, %27 : vector<8x128xf32>
    %29 = arith.truncf %12 : vector<8x128xf32> to vector<8x128xbf16>
    %c0_14 = arith.constant 0 : index
    %c0_15 = arith.constant 0 : index
    %30 = vector.load %arg9[%c0_14, %c0_15] : memref<256x256xbf16, #tpu.memory_space<vmem>>, vector<128x256xbf16>
    %cst_16 = arith.constant dense<0.000000e+00> : vector<8x256xf32>
    %31 = tpu.matmul %29, %30, %cst_16 {dimension_numbers = #tpu.dot_dimension_numbers<[1], [0], [0], [1], [0, 0, 1, 1], [], []>} : vector<8x128xbf16>, vector<128x256xbf16>, vector<8x256xf32> -> vector<8x256xf32>
    %32 = arith.truncf %28 : vector<8x128xf32> to vector<8x128xbf16>
    %c128 = arith.constant 128 : index
    %c0_17 = arith.constant 0 : index
    %33 = vector.load %arg9[%c128, %c0_17] : memref<256x256xbf16, #tpu.memory_space<vmem>>, vector<128x256xbf16>
    %cst_18 = arith.constant dense<0.000000e+00> : vector<8x256xf32>
    %34 = tpu.matmul %32, %33, %cst_18 {dimension_numbers = #tpu.dot_dimension_numbers<[1], [0], [0], [1], [0, 0, 1, 1], [], []>} : vector<8x128xbf16>, vector<128x256xbf16>, vector<8x256xf32> -> vector<8x256xf32>
    %35 = arith.addf %31, %34 : vector<8x256xf32>
    %c0_19 = arith.constant 0 : index
    %c0_20 = arith.constant 0 : index
    %36 = vector.load %arg10[%c0_19, %c0_20] : memref<1x256xf32, #tpu.memory_space<vmem>>, vector<1x256xf32>
    %37 = vector.broadcast %36 : vector<1x256xf32> to vector<8x256xf32>
    %38 = arith.addf %35, %37 : vector<8x256xf32>
    %cst_21 = arith.constant 0.000000e+00 : f32
    %39 = vector.broadcast %cst_21 : f32 to vector<8x256xf32>
    %40 = arith.maximumf %38, %39 : vector<8x256xf32>
    %41 = arith.truncf %40 : vector<8x256xf32> to vector<8x256xbf16>
    %c0_22 = arith.constant 0 : index
    %c0_23 = arith.constant 0 : index
    %42 = vector.load %arg11[%c0_22, %c0_23] : memref<512x1024xbf16, #tpu.memory_space<vmem>>, vector<256x1024xbf16>
    %cst_24 = arith.constant dense<0.000000e+00> : vector<8x1024xf32>
    %43 = tpu.matmul %41, %42, %cst_24 {dimension_numbers = #tpu.dot_dimension_numbers<[1], [0], [0], [1], [0, 0, 1, 1], [], []>} : vector<8x256xbf16>, vector<256x1024xbf16>, vector<8x1024xf32> -> vector<8x1024xf32>
    %c0_25 = arith.constant 0 : index
    %c0_26 = arith.constant 0 : index
    %44 = vector.load %arg3[%c0_25, %c0_26] : memref<8x256xf32, #tpu.memory_space<vmem>>, vector<8x256xf32>
    %45 = arith.truncf %44 : vector<8x256xf32> to vector<8x256xbf16>
    %c256 = arith.constant 256 : index
    %c0_27 = arith.constant 0 : index
    %46 = vector.load %arg11[%c256, %c0_27] : memref<512x1024xbf16, #tpu.memory_space<vmem>>, vector<256x1024xbf16>
    %cst_28 = arith.constant dense<0.000000e+00> : vector<8x1024xf32>
    %47 = tpu.matmul %45, %46, %cst_28 {dimension_numbers = #tpu.dot_dimension_numbers<[1], [0], [0], [1], [0, 0, 1, 1], [], []>} : vector<8x256xbf16>, vector<256x1024xbf16>, vector<8x1024xf32> -> vector<8x1024xf32>
    %48 = arith.addf %43, %47 : vector<8x1024xf32>
    %c0_29 = arith.constant 0 : index
    %c0_30 = arith.constant 0 : index
    %49 = vector.load %arg12[%c0_29, %c0_30] : memref<1x1024xf32, #tpu.memory_space<vmem>>, vector<1x1024xf32>
    %50 = vector.broadcast %49 : vector<1x1024xf32> to vector<8x1024xf32>
    %51 = arith.addf %48, %50 : vector<8x1024xf32>
    %52 = vector.extract_strided_slice %51 {offsets = [0, 0], sizes = [8, 256], strides = [1, 1]} : vector<8x1024xf32> to vector<8x256xf32>
    %cst_31 = arith.constant 5.000000e-01 : f32
    %53 = vector.broadcast %cst_31 : f32 to vector<8x256xf32>
    %54 = arith.mulf %53, %52 : vector<8x256xf32>
    %55 = math.tanh %54 : vector<8x256xf32>
    %cst_32 = arith.constant 1.000000e+00 : f32
    %56 = vector.broadcast %cst_32 : f32 to vector<8x256xf32>
    %57 = arith.addf %55, %56 : vector<8x256xf32>
    %cst_33 = arith.constant 5.000000e-01 : f32
    %58 = vector.broadcast %cst_33 : f32 to vector<8x256xf32>
    %59 = arith.mulf %58, %57 : vector<8x256xf32>
    %60 = vector.extract_strided_slice %51 {offsets = [0, 256], sizes = [8, 256], strides = [1, 1]} : vector<8x1024xf32> to vector<8x256xf32>
    %cst_34 = arith.constant 5.000000e-01 : f32
    %61 = vector.broadcast %cst_34 : f32 to vector<8x256xf32>
    %62 = arith.mulf %61, %60 : vector<8x256xf32>
    %63 = math.tanh %62 : vector<8x256xf32>
    %cst_35 = arith.constant 1.000000e+00 : f32
    %64 = vector.broadcast %cst_35 : f32 to vector<8x256xf32>
    %65 = arith.addf %63, %64 : vector<8x256xf32>
    %cst_36 = arith.constant 5.000000e-01 : f32
    %66 = vector.broadcast %cst_36 : f32 to vector<8x256xf32>
    %67 = arith.mulf %66, %65 : vector<8x256xf32>
    %68 = vector.extract_strided_slice %51 {offsets = [0, 512], sizes = [8, 256], strides = [1, 1]} : vector<8x1024xf32> to vector<8x256xf32>
    %69 = math.tanh %68 : vector<8x256xf32>
    %70 = vector.extract_strided_slice %51 {offsets = [0, 768], sizes = [8, 256], strides = [1, 1]} : vector<8x1024xf32> to vector<8x256xf32>
    %cst_37 = arith.constant 5.000000e-01 : f32
    %71 = vector.broadcast %cst_37 : f32 to vector<8x256xf32>
    %72 = arith.mulf %71, %70 : vector<8x256xf32>
    %73 = math.tanh %72 : vector<8x256xf32>
    %cst_38 = arith.constant 1.000000e+00 : f32
    %74 = vector.broadcast %cst_38 : f32 to vector<8x256xf32>
    %75 = arith.addf %73, %74 : vector<8x256xf32>
    %cst_39 = arith.constant 5.000000e-01 : f32
    %76 = vector.broadcast %cst_39 : f32 to vector<8x256xf32>
    %77 = arith.mulf %76, %75 : vector<8x256xf32>
    %c0_40 = arith.constant 0 : index
    %c0_41 = arith.constant 0 : index
    %78 = vector.load %arg4[%c0_40, %c0_41] : memref<8x256xf32, #tpu.memory_space<vmem>>, vector<8x256xf32>
    %79 = arith.mulf %67, %78 : vector<8x256xf32>
    %80 = arith.mulf %59, %69 : vector<8x256xf32>
    %81 = arith.addf %79, %80 : vector<8x256xf32>
    %82 = math.tanh %81 : vector<8x256xf32>
    %83 = arith.mulf %77, %82 : vector<8x256xf32>
    %c0_42 = arith.constant 0 : index
    %c0_43 = arith.constant 0 : index
    %84 = vector.load %arg16[%c0_42, %c0_43] : memref<8x256xf32, #tpu.memory_space<vmem>>, vector<8x256xf32>
    tpu.vector_store %arg16[%c0_42, %c0_43], %83 {strides = array<i32>} : memref<8x256xf32, #tpu.memory_space<vmem>>, vector<8x256xf32>,
    %c0_44 = arith.constant 0 : index
    %c0_45 = arith.constant 0 : index
    %85 = vector.load %arg17[%c0_44, %c0_45] : memref<8x256xf32, #tpu.memory_space<vmem>>, vector<8x256xf32>
    tpu.vector_store %arg17[%c0_44, %c0_45], %81 {strides = array<i32>} : memref<8x256xf32, #tpu.memory_space<vmem>>, vector<8x256xf32>,
    %86 = arith.truncf %83 : vector<8x256xf32> to vector<8x256xbf16>
    %c0_46 = arith.constant 0 : index
    %c0_47 = arith.constant 0 : index
    %87 = vector.load %arg13[%c0_46, %c0_47] : memref<256x8xbf16, #tpu.memory_space<vmem>>, vector<256x8xbf16>
    %cst_48 = arith.constant dense<0.000000e+00> : vector<8x8xf32>
    %88 = tpu.matmul %86, %87, %cst_48 {dimension_numbers = #tpu.dot_dimension_numbers<[1], [0], [0], [1], [0, 0, 1, 1], [], []>} : vector<8x256xbf16>, vector<256x8xbf16>, vector<8x8xf32> -> vector<8x8xf32>
    %c0_49 = arith.constant 0 : index
    %c0_50 = arith.constant 0 : index
    %89 = vector.load %arg14[%c0_49, %c0_50] : memref<1x8xf32, #tpu.memory_space<vmem>>, vector<1x8xf32>
    %90 = vector.broadcast %89 : vector<1x8xf32> to vector<8x8xf32>
    %91 = arith.addf %88, %90 : vector<8x8xf32>
    %92 = vector.extract_strided_slice %91 {offsets = [0, 0], sizes = [8, 2], strides = [1, 1]} : vector<8x8xf32> to vector<8x2xf32>
    %93 = vector.extract_strided_slice %91 {offsets = [0, 2], sizes = [8, 3], strides = [1, 1]} : vector<8x8xf32> to vector<8x3xf32>
    %cst_51 = arith.constant 2.500000e-01 : f32
    %94 = vector.broadcast %cst_51 : f32 to vector<8x2xf32>
    %95 = arith.mulf %94, %2 : vector<8x2xf32>
    %96 = arith.addf %92, %95 : vector<8x2xf32>
    %cst_52 = arith.constant -5.000000e-01 : f32
    %97 = vector.broadcast %cst_52 : f32 to vector<8x2xf32>
    %98 = arith.mulf %97, %2 : vector<8x2xf32>
    %99 = arith.mulf %98, %2 : vector<8x2xf32>
    %cst_53 = arith.constant -1.38629436 : f32
    %100 = vector.broadcast %cst_53 : f32 to vector<8x2xf32>
    %101 = arith.subf %99, %100 : vector<8x2xf32>
    %cst_54 = arith.constant 0.918938517 : f32
    %102 = vector.broadcast %cst_54 : f32 to vector<8x2xf32>
    %103 = arith.subf %101, %102 : vector<8x2xf32>
    %104 = math.tanh %96 : vector<8x2xf32>
    %cst_55 = arith.constant dense<0xFF800000> : vector<8xf32>
    %105 = vector.multi_reduction <maximumf>, %93, %cst_55 [1] : vector<8x3xf32> to vector<8xf32>
    %106 = vector.shape_cast %105 : vector<8xf32> to vector<8x1xf32>
    %107 = vector.broadcast %106 : vector<8x1xf32> to vector<8x3xf32>
    %108 = arith.subf %93, %107 : vector<8x3xf32>
    %109 = vector.broadcast %106 : vector<8x1xf32> to vector<8x3xf32>
    %110 = arith.subf %93, %109 : vector<8x3xf32>
    %111 = math.exp %110 : vector<8x3xf32>
    %cst_56 = arith.constant dense<0.000000e+00> : vector<8xf32>
    %112 = vector.multi_reduction <add>, %111, %cst_56 [1] : vector<8x3xf32> to vector<8xf32>
    %113 = vector.shape_cast %112 : vector<8xf32> to vector<8x1xf32>
    %114 = math.log %113 : vector<8x1xf32>
    %115 = vector.broadcast %114 : vector<8x1xf32> to vector<8x3xf32>
    %116 = arith.subf %108, %115 : vector<8x3xf32>
    %117 = arith.addf %116, %3 : vector<8x3xf32>
    %cst_57 = arith.constant dense<0xFF800000> : vector<8xf32>
    %118 = vector.multi_reduction <maximumf>, %117, %cst_57 [1] : vector<8x3xf32> to vector<8xf32>
    %119 = vector.shape_cast %118 : vector<8xf32> to vector<8x1xf32>
    %120 = tpu.iota {dimensions = array<i32: 1>} : vector<8x3xi32>
    %121 = vector.broadcast %119 : vector<8x1xf32> to vector<8x3xf32>
    %122 = arith.cmpf oge, %117, %121 : vector<8x3xf32>
    %c3_i32 = arith.constant 3 : i32
    %123 = vector.broadcast %c3_i32 : i32 to vector<8x3xi32>
    %124 = arith.select %122, %120, %123 : vector<8x3xi1>, vector<8x3xi32>
    %cst_58 = arith.constant dense<2147483647> : vector<8xi32>
    %125 = vector.multi_reduction <minsi>, %124, %cst_58 [1] : vector<8x3xi32> to vector<8xi32>
    %126 = vector.shape_cast %125 : vector<8xi32> to vector<8x1xi32>
    %127 = vector.broadcast %126 : vector<8x1xi32> to vector<8x3xi32>
    %128 = arith.cmpi eq, %120, %127 : vector<8x3xi32>
    %cst_59 = arith.constant 0.000000e+00 : f32
    %129 = vector.broadcast %cst_59 : f32 to vector<8x3xf32>
    %130 = arith.select %128, %116, %129 : vector<8x3xi1>, vector<8x3xf32>
    %cst_60 = arith.constant dense<0.000000e+00> : vector<8xf32>
    %131 = vector.multi_reduction <add>, %130, %cst_60 [1] : vector<8x3xf32> to vector<8xf32>
    %132 = vector.shape_cast %131 : vector<8xf32> to vector<8x1xf32>
    %c1_i32 = arith.constant 1 : i32
    %133 = vector.broadcast %c1_i32 : i32 to vector<8x1xi32>
    %134 = arith.subi %126, %133 : vector<8x1xi32>
    %135 = arith.sitofp %134 : vector<8x1xi32> to vector<8x1xf32>
    %cst_61 = arith.constant 0.000000e+00 : f32
    %136 = vector.broadcast %cst_61 : f32 to vector<8x122xf32>
    %137 = tpu.concatenate %135, %132, %103, %104, %136 in 1 : vector<8x1xf32>, vector<8x1xf32>, vector<8x2xf32>, vector<8x2xf32>, vector<8x122xf32> -> vector<8x128xf32>
    %c0_62 = arith.constant 0 : index
    %c0_63 = arith.constant 0 : index
    %138 = vector.load %arg15[%c0_62, %c0_63] : memref<8x128xf32, #tpu.memory_space<vmem>>, vector<8x128xf32>
    tpu.vector_store %arg15[%c0_62, %c0_63], %137 {strides = array<i32>} : memref<8x128xf32, #tpu.memory_space<vmem>>, vector<8x128xf32>,
    return
  }
  func.func @transform_0(%arg0: i32) -> (i32, i32) {
    %c0_i32 = arith.constant 0 : i32
    %c0_i32_0 = arith.constant 0 : i32
    return %arg0, %c0_i32 : i32, i32
  }
  func.func @transform_1(%arg0: i32) -> (i32, i32) {
    %c0_i32 = arith.constant 0 : i32
    %c0_i32_0 = arith.constant 0 : i32
    return %arg0, %c0_i32 : i32, i32
  }
  func.func @transform_2(%arg0: i32) -> (i32, i32) {
    %c0_i32 = arith.constant 0 : i32
    %c0_i32_0 = arith.constant 0 : i32
    return %arg0, %c0_i32 : i32, i32
  }
  func.func @transform_3(%arg0: i32) -> (i32, i32) {
    %c0_i32 = arith.constant 0 : i32
    %c0_i32_0 = arith.constant 0 : i32
    return %arg0, %c0_i32 : i32, i32
  }
  func.func @transform_4(%arg0: i32) -> (i32, i32) {
    %c0_i32 = arith.constant 0 : i32
    %c0_i32_0 = arith.constant 0 : i32
    %c0_i32_1 = arith.constant 0 : i32
    return %c0_i32, %c0_i32_0 : i32, i32
  }
  func.func @transform_5(%arg0: i32) -> (i32, i32) {
    %c0_i32 = arith.constant 0 : i32
    %c0_i32_0 = arith.constant 0 : i32
    %c0_i32_1 = arith.constant 0 : i32
    return %c0_i32, %c0_i32_0 : i32, i32
  }
  func.func @transform_6(%arg0: i32) -> (i32, i32) {
    %c0_i32 = arith.constant 0 : i32
    %c0_i32_0 = arith.constant 0 : i32
    %c0_i32_1 = arith.constant 0 : i32
    return %c0_i32, %c0_i32_0 : i32, i32
  }
  func.func @transform_7(%arg0: i32) -> (i32, i32) {
    %c0_i32 = arith.constant 0 : i32
    %c0_i32_0 = arith.constant 0 : i32
    %c0_i32_1 = arith.constant 0 : i32
    return %c0_i32, %c0_i32_0 : i32, i32
  }
  func.func @transform_8(%arg0: i32) -> (i32, i32) {
    %c0_i32 = arith.constant 0 : i32
    %c0_i32_0 = arith.constant 0 : i32
    %c0_i32_1 = arith.constant 0 : i32
    return %c0_i32, %c0_i32_0 : i32, i32
  }
  func.func @transform_9(%arg0: i32) -> (i32, i32) {
    %c0_i32 = arith.constant 0 : i32
    %c0_i32_0 = arith.constant 0 : i32
    %c0_i32_1 = arith.constant 0 : i32
    return %c0_i32, %c0_i32_0 : i32, i32
  }
  func.func @transform_10(%arg0: i32) -> (i32, i32) {
    %c0_i32 = arith.constant 0 : i32
    %c0_i32_0 = arith.constant 0 : i32
    %c0_i32_1 = arith.constant 0 : i32
    return %c0_i32, %c0_i32_0 : i32, i32
  }
  func.func @transform_11(%arg0: i32) -> (i32, i32) {
    %c0_i32 = arith.constant 0 : i32
    %c0_i32_0 = arith.constant 0 : i32
    %c0_i32_1 = arith.constant 0 : i32
    return %c0_i32, %c0_i32_0 : i32, i32
  }
  func.func @transform_12(%arg0: i32) -> (i32, i32) {
    %c0_i32 = arith.constant 0 : i32
    %c0_i32_0 = arith.constant 0 : i32
    %c0_i32_1 = arith.constant 0 : i32
    return %c0_i32, %c0_i32_0 : i32, i32
  }
  func.func @transform_13(%arg0: i32) -> (i32, i32) {
    %c0_i32 = arith.constant 0 : i32
    %c0_i32_0 = arith.constant 0 : i32
    %c0_i32_1 = arith.constant 0 : i32
    return %c0_i32, %c0_i32_0 : i32, i32
  }
  func.func @transform_14(%arg0: i32) -> (i32, i32) {
    %c0_i32 = arith.constant 0 : i32
    %c0_i32_0 = arith.constant 0 : i32
    return %arg0, %c0_i32 : i32, i32
  }
  func.func @transform_15(%arg0: i32) -> (i32, i32) {
    %c0_i32 = arith.constant 0 : i32
    %c0_i32_0 = arith.constant 0 : i32
    return %arg0, %c0_i32 : i32, i32
  }
  func.func @transform_16(%arg0: i32) -> (i32, i32) {
    %c0_i32 = arith.constant 0 : i32
    %c0_i32_0 = arith.constant 0 : i32
    return %arg0, %c0_i32 : i32, i32
  }
}

</mosaic_0001>

<llo_original>
// kernel: custom-call
$region0: #{custom-call}
  %s0 = inlined_call_operand.vmem [shape: f32[2,1,24,24], index: 0, kind: output, shape index: {}]

// kernel: model_forward.1
$region0: #{model_forward.1}
  #allocation0 [shape = 'u32[]', space=smem, size = 0x4, offset = 0x4, fixed_abs, tag = 'smem constant byte address 0x4 - core index']
  #allocation1 [shape = 'u32[144,128]{1,0:T(1,128)}', space=vmem, size = 0x12000, scoped, tag = 'internal scratch']
  %s0 = inlined_call_operand.vmem [shape: f32[8,128], index: 0, kind: input, shape index: {}]
  %s1 = inlined_call_operand.vmem [shape: f32[8,128], index: 1, kind: input, shape index: {}]
  %s2 = inlined_call_operand.vmem [shape: f32[8,256], index: 2, kind: input, shape index: {}, may-alias: {2,15}]
  %s3 = inlined_call_operand.vmem [shape: f32[8,256], index: 3, kind: input, shape index: {}, may-alias: {3,16}]
  %s4 = inlined_call_operand.vmem [shape: bf16[128,128], index: 4, kind: input, shape index: {}]
  %s5 = inlined_call_operand.vmem [shape: f32[1,128], index: 5, kind: input, shape index: {}]
  %s6 = inlined_call_operand.vmem [shape: f32[2,128], index: 6, kind: input, shape index: {}]
  %s7 = inlined_call_operand.vmem [shape: f32[1,128], index: 7, kind: input, shape index: {}]
  %s8 = inlined_call_operand.vmem [shape: bf16[256,256], index: 8, kind: input, shape index: {}]
  %s9 = inlined_call_operand.vmem [shape: f32[1,256], index: 9, kind: input, shape index: {}]
  %s10 = inlined_call_operand.vmem [shape: bf16[512,1024], index: 10, kind: input, shape index: {}]
  %s11 = inlined_call_operand.vmem [shape: f32[1,1024], index: 11, kind: input, shape index: {}]
  %s12 = inlined_call_operand.vmem [shape: bf16[256,8], index: 12, kind: input, shape index: {}]
  %s13 = inlined_call_operand.vmem [shape: f32[1,8], index: 13, kind: input, shape index: {}]
  %s14 = inlined_call_operand.vmem [shape: f32[8,128], index: 14, kind: output, shape index: {0}]
  %s15 = inlined_call_operand.vmem [shape: f32[8,256], index: 15, kind: output, shape index: {1}, may-alias: {2,15}]
  %s16 = inlined_call_operand.vmem [shape: f32[8,256], index: 16, kind: output, shape index: {2}, may-alias: {3,16}]
  %17 = xla_tuple %s14, %s15, %s16
  %s18 = sld [smem:[#allocation0]]
  $region82: #{model_forward.1} parent=0
    _
  %s20 = ssub.s32 1, %s18
  %s21 = scalar_select 0, %s20, %s18
  // Predicated region
  $region2: #{model_forward.1} parent=0 // pred_check
    _
  $region3: #{model_forward.1} parent=0 // pred_check_branch
    %23 = sbr.rel (0) target = $region5
  $region4: #{model_forward.1} parent=0 // pred_region
    _
  $region5: #{model_forward.1} parent=0 // pred_fallthru
    _
  // Predicated region
  $region6: #{model_forward.1} parent=0 // pred_check
    _
  $region7: #{model_forward.1} parent=0 // pred_check_branch
    %25 = sbr.rel (0) target = $region9
  $region8: #{model_forward.1} parent=0 // pred_region
    _
  $region9: #{model_forward.1} parent=0 // pred_fallthru
    _
  // Predicated region
  $region10: #{model_forward.1} parent=0 // pred_check
    _
  $region11: #{model_forward.1} parent=0 // pred_check_branch
    %27 = sbr.rel (0) target = $region13
  $region12: #{model_forward.1} parent=0 // pred_region
    _
  $region13: #{model_forward.1} parent=0 // pred_fallthru
    _
  // Predicated region
  $region14: #{model_forward.1} parent=0 // pred_check
    _
  $region15: #{model_forward.1} parent=0 // pred_check_branch
    %29 = sbr.rel (0) target = $region17
  $region16: #{model_forward.1} parent=0 // pred_region
    _
  $region17: #{model_forward.1} parent=0 // pred_fallthru
    _
  // Predicated region
  $region18: #{model_forward.1} parent=0 // pred_check
    _
  $region19: #{model_forward.1} parent=0 // pred_check_branch
    %31 = sbr.rel (0) target = $region21
  $region20: #{model_forward.1} parent=0 // pred_region
    _
  $region21: #{model_forward.1} parent=0 // pred_fallthru
    _
  // Predicated region
  $region22: #{model_forward.1} parent=0 // pred_check
    _
  $region23: #{model_forward.1} parent=0 // pred_check_branch
    %33 = sbr.rel (0) target = $region25
  $region24: #{model_forward.1} parent=0 // pred_region
    _
  $region25: #{model_forward.1} parent=0 // pred_fallthru
    _
  // Predicated region
  $region26: #{model_forward.1} parent=0 // pred_check
    _
  $region27: #{model_forward.1} parent=0 // pred_check_branch
    %35 = sbr.rel (0) target = $region29
  $region28: #{model_forward.1} parent=0 // pred_region
    _
  $region29: #{model_forward.1} parent=0 // pred_fallthru
    _
  // Predicated region
  $region30: #{model_forward.1} parent=0 // pred_check
    _
  $region31: #{model_forward.1} parent=0 // pred_check_branch
    %37 = sbr.rel (0) target = $region33
  $region32: #{model_forward.1} parent=0 // pred_region
    _
  $region33: #{model_forward.1} parent=0 // pred_fallthru
    _
  // Predicated region
  $region34: #{model_forward.1} parent=0 // pred_check
    _
  $region35: #{model_forward.1} parent=0 // pred_check_branch
    %39 = sbr.rel (0) target = $region37
  $region36: #{model_forward.1} parent=0 // pred_region
    _
  $region37: #{model_forward.1} parent=0 // pred_fallthru
    _
  // Predicated region
  $region38: #{model_forward.1} parent=0 // pred_check
    _
  $region39: #{model_forward.1} parent=0 // pred_check_branch
    %41 = sbr.rel (0) target = $region41
  $region40: #{model_forward.1} parent=0 // pred_region
    _
  $region41: #{model_forward.1} parent=0 // pred_fallthru
    _
  // Predicated region
  $region42: #{model_forward.1} parent=0 // pred_check
    _
  $region43: #{model_forward.1} parent=0 // pred_check_branch
    %43 = sbr.rel (0) target = $region45
  $region44: #{model_forward.1} parent=0 // pred_region
    _
  $region45: #{model_forward.1} parent=0 // pred_fallthru
    _
  // Predicated region
  $region46: #{model_forward.1} parent=0 // pred_check
    _
  $region47: #{model_forward.1} parent=0 // pred_check_branch
    %45 = sbr.rel (0) target = $region49
  $region48: #{model_forward.1} parent=0 // pred_region
    _
  $region49: #{model_forward.1} parent=0 // pred_fallthru
    _
  // Predicated region
  $region50: #{model_forward.1} parent=0 // pred_check
    _
  $region51: #{model_forward.1} parent=0 // pred_check_branch
    %47 = sbr.rel (0) target = $region53
  $region52: #{model_forward.1} parent=0 // pred_region
    _
  $region53: #{model_forward.1} parent=0 // pred_fallthru
    _
  // Predicated region
  $region54: #{model_forward.1} parent=0 // pred_check
    _
  $region55: #{model_forward.1} parent=0 // pred_check_branch
    %49 = sbr.rel (0) target = $region57
  $region56: #{model_forward.1} parent=0 // pred_region
    _
  $region57: #{model_forward.1} parent=0 // pred_fallthru
    _
  %v51 = vld [vmem:[%s1] sm:$0xff]
  %v52 = vld [vmem:[%s0] sm:$0xff]
  %v53 = vpack.c.bf16 %v52, %v52
  %v54 = vld [vmem:[%s4] sm:$0xf]
  %v55 = vld [vmem:[%s4 + $0x4] sm:$0xf]
  %v56 = vld [vmem:[%s4 + $0x8] sm:$0xf]
  %v57 = vld [vmem:[%s4 + $0xc] sm:$0xf]
  %v58 = vld [vmem:[%s4 + $0x10] sm:$0xf]
  %v59 = vld [vmem:[%s4 + $0x14] sm:$0xf]
  %v60 = vld [vmem:[%s4 + $0x18] sm:$0xf]
  %v61 = vld [vmem:[%s4 + $0x1c] sm:$0xf]
  %v62 = vld [vmem:[%s4 + $0x20] sm:$0xf]
  %v63 = vld [vmem:[%s4 + $0x24] sm:$0xf]
  %v64 = vld [vmem:[%s4 + $0x28] sm:$0xf]
  %v65 = vld [vmem:[%s4 + $0x2c] sm:$0xf]
  %v66 = vld [vmem:[%s4 + $0x30] sm:$0xf]
  %v67 = vld [vmem:[%s4 + $0x34] sm:$0xf]
  %v68 = vld [vmem:[%s4 + $0x38] sm:$0xf]
  %v69 = vld [vmem:[%s4 + $0x3c] sm:$0xf]
  %v70 = vld [vmem:[%s5] sm:$0x1]
  %v72 = vlaneseq
  %v73 = vshrl.u32 %v72, 7
  %v74 = vsub.s32 0, %v73
  %v75 = vrot.slane %v70, %v74
  %v93 = vunpack.c.l.b16 %v54
  %v94 = vunpack.c.l.b16 %v55
  %v95 = vunpack.c.l.b16 %v56
  %v96 = vunpack.c.l.b16 %v57
  %v97 = vunpack.c.l.b16 %v58
  %v98 = vunpack.c.l.b16 %v59
  %v99 = vunpack.c.l.b16 %v60
  %v100 = vunpack.c.l.b16 %v61
  %v101 = vunpack.c.l.b16 %v62
  %v102 = vunpack.c.l.b16 %v63
  %v103 = vunpack.c.l.b16 %v64
  %v104 = vunpack.c.l.b16 %v65
  %v105 = vunpack.c.l.b16 %v66
  %v106 = vunpack.c.l.b16 %v67
  %v107 = vunpack.c.l.b16 %v68
  %v108 = vunpack.c.l.b16 %v69
  %v109 = vpack.c.b16 %v94, %v93
  %v110 = vpack.c.b16 %v96, %v95
  %v111 = vpack.c.b16 %v98, %v97
  %v112 = vpack.c.b16 %v100, %v99
  %v113 = vpack.c.b16 %v102, %v101
  %v114 = vpack.c.b16 %v104, %v103
  %v115 = vpack.c.b16 %v106, %v105
  %v116 = vpack.c.b16 %v108, %v107
  %125 = vmatprep.subr.bf16.mxu0 0
  %126 = vmatpush1.bf16.msra.mxu0 %v109
  %127 = vmatprep.subr.bf16.mxu0 0
  %128 = vmatpush1.bf16.msra.mxu0 %v110
  %129 = vmatprep.subr.bf16.mxu0 0
  %130 = vmatpush1.bf16.msra.mxu0 %v111
  %131 = vmatprep.subr.bf16.mxu0 0
  %132 = vmatpush1.bf16.msra.mxu0 %v112
  %133 = vmatprep.subr.bf16.mxu0 0
  %134 = vmatpush1.bf16.msra.mxu0 %v113
  %135 = vmatprep.subr.bf16.mxu0 0
  %136 = vmatpush1.bf16.msra.mxu0 %v114
  %137 = vmatprep.subr.bf16.mxu0 0
  %138 = vmatpush1.bf16.msra.mxu0 %v115
  %139 = vmatprep.subr.bf16.mxu0 0
  %140 = vmatpush1.bf16.msra.mxu0 %v116
  %141 = vmatprep.subr.bf16.mxu0 0
  %142 = vmatpush1.bf16.msra.mxu0 0
  %143 = vmatprep.subr.bf16.mxu0 0
  %144 = vmatpush1.bf16.msra.mxu0 0
  %145 = vmatprep.subr.bf16.mxu0 0
  %146 = vmatpush1.bf16.msra.mxu0 0
  %147 = vmatprep.subr.bf16.mxu0 0
  %148 = vmatpush1.bf16.msra.mxu0 0
  %149 = vmatprep.subr.bf16.mxu0 0
  %150 = vmatpush1.bf16.msra.mxu0 0
  %151 = vmatprep.subr.bf16.mxu0 0
  %152 = vmatpush1.bf16.msra.mxu0 0
  %153 = vmatprep.subr.bf16.mxu0 0
  %154 = vmatpush1.bf16.msra.mxu0 0
  %155 = vmatprep.subr.bf16.mxu0 0
  %156 = vmatpush1.bf16.msra.mxu0 0
  %157 = vmatprep.mubr.bf16.mxu0 0
  %158 = vmatmul.mubr.bf16.gmra.mrb[0].mxu0 %v53
  %v159 = vpop.f32.mrb[0].mxu0
  %v160 = vadd.f32 %v75, %v159
  %v161 = vpop.f32.mrb[0].mxu0
  %v162 = vpop.f32.mrb[0].mxu0
  %v163 = vpop.f32.mrb[0].mxu0
  %164 = vdwg.mxu0
  %v165 = vmax.f32 %v160, 0.0
  %v166 = vld [vmem:[%s6] sm:$0x1]
  %168 = vset.pattern.permute.xlu0 0
  %169 = vperm.xlu0 %168, %v51
  %v170 = vpop.permute.xlu0 %169
  %v172 = vlaneseq
  %v173 = vshrl.u32 %v172, 7
  %v174 = vsub.s32 0, %v173
  %v175 = vrot.slane %v166, %v174
  %v176 = vmul.f32 %v170, %v175
  %v177 = vld [vmem:[%s6 + $0x1] sm:$0x1]
  %178 = vset.pattern.permute.xlu0 1
  %179 = vperm.xlu0 %178, %v51
  %v180 = vpop.permute.xlu0 %179
  %v182 = vlaneseq
  %v183 = vshrl.u32 %v182, 7
  %v184 = vsub.s32 0, %v183
  %v185 = vrot.slane %v177, %v184
  %v186 = vmul.f32 %v180, %v185
  %v187 = vadd.f32 %v176, %v186
  %v188 = vld [vmem:[%s7] sm:$0x1]
  %v190 = vlaneseq
  %v191 = vshrl.u32 %v190, 7
  %v192 = vsub.s32 0, %v191
  %v193 = vrot.slane %v188, %v192
  %v195 = vadd.f32 %v187, %v193
  %v196 = vmax.f32 %v195, 0.0
  %v197 = vpack.c.bf16 %v165, %v165
  %v198 = vld [vmem:[%s8] sm:$0xff]
  %v199 = vld [vmem:[%s8 + $0x8] sm:$0xff]
  %v200 = vld [vmem:[%s8 + $0x10] sm:$0xff]
  %v201 = vld [vmem:[%s8 + $0x18] sm:$0xff]
  %v202 = vld [vmem:[%s8 + $0x20] sm:$0xff]
  %v203 = vld [vmem:[%s8 + $0x28] sm:$0xff]
  %v204 = vld [vmem:[%s8 + $0x30] sm:$0xff]
  %v205 = vld [vmem:[%s8 + $0x38] sm:$0xff]
  %v206 = vld [vmem:[%s8 + $0x40] sm:$0xff]
  %v207 = vld [vmem:[%s8 + $0x48] sm:$0xff]
  %v208 = vld [vmem:[%s8 + $0x50] sm:$0xff]
  %v209 = vld [vmem:[%s8 + $0x58] sm:$0xff]
  %v210 = vld [vmem:[%s8 + $0x60] sm:$0xff]
  %v211 = vld [vmem:[%s8 + $0x68] sm:$0xff]
  %v212 = vld [vmem:[%s8 + $0x70] sm:$0xff]
  %v213 = vld [vmem:[%s8 + $0x78] sm:$0xff]
  %v214 = vpack.c.bf16 %v196, %v196
  %v215 = vld [vmem:[%s8 + $0x80] sm:$0xff]
  %v216 = vld [vmem:[%s8 + $0x88] sm:$0xff]
  %v217 = vld [vmem:[%s8 + $0x90] sm:$0xff]
  %v218 = vld [vmem:[%s8 + $0x98] sm:$0xff]
  %v219 = vld [vmem:[%s8 + $0xa0] sm:$0xff]
  %v220 = vld [vmem:[%s8 + $0xa8] sm:$0xff]
  %v221 = vld [vmem:[%s8 + $0xb0] sm:$0xff]
  %v222 = vld [vmem:[%s8 + $0xb8] sm:$0xff]
  %v223 = vld [vmem:[%s8 + $0xc0] sm:$0xff]
  %v224 = vld [vmem:[%s8 + $0xc8] sm:$0xff]
  %v225 = vld [vmem:[%s8 + $0xd0] sm:$0xff]
  %v226 = vld [vmem:[%s8 + $0xd8] sm:$0xff]
  %v227 = vld [vmem:[%s8 + $0xe0] sm:$0xff]
  %v228 = vld [vmem:[%s8 + $0xe8] sm:$0xff]
  %v229 = vld [vmem:[%s8 + $0xf0] sm:$0xff]
  %v230 = vld [vmem:[%s8 + $0xf8] sm:$0xff]
  %v247 = vunpack.c.l.b16 %v215
  %v248 = vunpack.c.h.b16 %v215
  %v249 = vunpack.c.l.b16 %v216
  %v250 = vunpack.c.h.b16 %v216
  %v251 = vunpack.c.l.b16 %v217
  %v252 = vunpack.c.h.b16 %v217
  %v253 = vunpack.c.l.b16 %v218
  %v254 = vunpack.c.h.b16 %v218
  %v255 = vunpack.c.l.b16 %v219
  %v256 = vunpack.c.h.b16 %v219
  %v257 = vunpack.c.l.b16 %v220
  %v258 = vunpack.c.h.b16 %v220
  %v259 = vunpack.c.l.b16 %v221
  %v260 = vunpack.c.h.b16 %v221
  %v261 = vunpack.c.l.b16 %v222
  %v262 = vunpack.c.h.b16 %v222
  %v263 = vunpack.c.l.b16 %v223
  %v264 = vunpack.c.h.b16 %v223
  %v265 = vunpack.c.l.b16 %v224
  %v266 = vunpack.c.h.b16 %v224
  %v267 = vunpack.c.l.b16 %v225
  %v268 = vunpack.c.h.b16 %v225
  %v269 = vunpack.c.l.b16 %v226
  %v270 = vunpack.c.h.b16 %v226
  %v271 = vunpack.c.l.b16 %v227
  %v272 = vunpack.c.h.b16 %v227
  %v273 = vunpack.c.l.b16 %v228
  %v274 = vunpack.c.h.b16 %v228
  %v275 = vunpack.c.l.b16 %v229
  %v276 = vunpack.c.h.b16 %v229
  %v277 = vunpack.c.l.b16 %v230
  %v278 = vunpack.c.h.b16 %v230
  %v279 = vpack.c.b16 %v249, %v247
  %v280 = vpack.c.b16 %v250, %v248
  %v281 = vpack.c.b16 %v253, %v251
  %v282 = vpack.c.b16 %v254, %v252
  %v283 = vpack.c.b16 %v257, %v255
  %v284 = vpack.c.b16 %v258, %v256
  %v285 = vpack.c.b16 %v261, %v259
  %v286 = vpack.c.b16 %v262, %v260
  %v287 = vpack.c.b16 %v265, %v263
  %v288 = vpack.c.b16 %v266, %v264
  %v289 = vpack.c.b16 %v269, %v267
  %v290 = vpack.c.b16 %v270, %v268
  %v291 = vpack.c.b16 %v273, %v271
  %v292 = vpack.c.b16 %v274, %v272
  %v293 = vpack.c.b16 %v277, %v275
  %v294 = vpack.c.b16 %v278, %v276
  %311 = vmatprep.subr.bf16.mxu0 %v280
  %312 = vmatpush1.bf16.msra.mxu0 %v279
  %313 = vmatprep.subr.bf16.mxu0 %v282
  %314 = vmatpush1.bf16.msra.mxu0 %v281
  %315 = vmatprep.subr.bf16.mxu0 %v284
  %316 = vmatpush1.bf16.msra.mxu0 %v283
  %317 = vmatprep.subr.bf16.mxu0 %v286
  %318 = vmatpush1.bf16.msra.mxu0 %v285
  %319 = vmatprep.subr.bf16.mxu0 %v288
  %320 = vmatpush1.bf16.msra.mxu0 %v287
  %321 = vmatprep.subr.bf16.mxu0 %v290
  %322 = vmatpush1.bf16.msra.mxu0 %v289
  %323 = vmatprep.subr.bf16.mxu0 %v292
  %324 = vmatpush1.bf16.msra.mxu0 %v291
  %325 = vmatprep.subr.bf16.mxu0 %v294
  %326 = vmatpush1.bf16.msra.mxu0 %v293
  %327 = vmatprep.subr.bf16.mxu0 0
  %328 = vmatpush1.bf16.msra.mxu0 0
  %329 = vmatprep.subr.bf16.mxu0 0
  %330 = vmatpush1.bf16.msra.mxu0 0
  %331 = vmatprep.subr.bf16.mxu0 0
  %332 = vmatpush1.bf16.msra.mxu0 0
  %333 = vmatprep.subr.bf16.mxu0 0
  %334 = vmatpush1.bf16.msra.mxu0 0
  %335 = vmatprep.subr.bf16.mxu0 0
  %336 = vmatpush1.bf16.msra.mxu0 0
  %337 = vmatprep.subr.bf16.mxu0 0
  %338 = vmatpush1.bf16.msra.mxu0 0
  %339 = vmatprep.subr.bf16.mxu0 0
  %340 = vmatpush1.bf16.msra.mxu0 0
  %341 = vmatprep.subr.bf16.mxu0 0
  %342 = vmatpush1.bf16.msra.mxu0 0
  %343 = vmatprep.mubr.bf16.mxu0 0
  %344 = vmatmul.mubr.bf16.gmra.mrb[0].mxu0 %v214
  %v345 = vpop.f32.mrb[0].mxu0
  %v346 = vadd.f32 0.0, %v345
  %v347 = vpop.f32.mrb[0].mxu0
  %v348 = vadd.f32 0.0, %v347
  %v349 = vpop.f32.mrb[0].mxu0
  %v350 = vpop.f32.mrb[0].mxu0
  %351 = vdwg.mxu0
  %v368 = vunpack.c.l.b16 %v198
  %v369 = vunpack.c.h.b16 %v198
  %v370 = vunpack.c.l.b16 %v199
  %v371 = vunpack.c.h.b16 %v199
  %v372 = vunpack.c.l.b16 %v200
  %v373 = vunpack.c.h.b16 %v200
  %v374 = vunpack.c.l.b16 %v201
  %v375 = vunpack.c.h.b16 %v201
  %v376 = vunpack.c.l.b16 %v202
  %v377 = vunpack.c.h.b16 %v202
  %v378 = vunpack.c.l.b16 %v203
  %v379 = vunpack.c.h.b16 %v203
  %v380 = vunpack.c.l.b16 %v204
  %v381 = vunpack.c.h.b16 %v204
  %v382 = vunpack.c.l.b16 %v205
  %v383 = vunpack.c.h.b16 %v205
  %v384 = vunpack.c.l.b16 %v206
  %v385 = vunpack.c.h.b16 %v206
  %v386 = vunpack.c.l.b16 %v207
  %v387 = vunpack.c.h.b16 %v207
  %v388 = vunpack.c.l.b16 %v208
  %v389 = vunpack.c.h.b16 %v208
  %v390 = vunpack.c.l.b16 %v209
  %v391 = vunpack.c.h.b16 %v209
  %v392 = vunpack.c.l.b16 %v210
  %v393 = vunpack.c.h.b16 %v210
  %v394 = vunpack.c.l.b16 %v211
  %v395 = vunpack.c.h.b16 %v211
  %v396 = vunpack.c.l.b16 %v212
  %v397 = vunpack.c.h.b16 %v212
  %v398 = vunpack.c.l.b16 %v213
  %v399 = vunpack.c.h.b16 %v213
  %v400 = vpack.c.b16 %v370, %v368
  %v401 = vpack.c.b16 %v371, %v369
  %v402 = vpack.c.b16 %v374, %v372
  %v403 = vpack.c.b16 %v375, %v373
  %v404 = vpack.c.b16 %v378, %v376
  %v405 = vpack.c.b16 %v379, %v377
  %v406 = vpack.c.b16 %v382, %v380
  %v407 = vpack.c.b16 %v383, %v381
  %v408 = vpack.c.b16 %v386, %v384
  %v409 = vpack.c.b16 %v387, %v385
  %v410 = vpack.c.b16 %v390, %v388
  %v411 = vpack.c.b16 %v391, %v389
  %v412 = vpack.c.b16 %v394, %v392
  %v413 = vpack.c.b16 %v395, %v393
  %v414 = vpack.c.b16 %v398, %v396
  %v415 = vpack.c.b16 %v399, %v397
  %432 = vmatprep.subr.bf16.mxu0 %v401
  %433 = vmatpush1.bf16.msra.mxu0 %v400
  %434 = vmatprep.subr.bf16.mxu0 %v403
  %435 = vmatpush1.bf16.msra.mxu0 %v402
  %436 = vmatprep.subr.bf16.mxu0 %v405
  %437 = vmatpush1.bf16.msra.mxu0 %v404
  %438 = vmatprep.subr.bf16.mxu0 %v407
  %439 = vmatpush1.bf16.msra.mxu0 %v406
  %440 = vmatprep.subr.bf16.mxu0 %v409
  %441 = vmatpush1.bf16.msra.mxu0 %v408
  %442 = vmatprep.subr.bf16.mxu0 %v411
  %443 = vmatpush1.bf16.msra.mxu0 %v410
  %444 = vmatprep.subr.bf16.mxu0 %v413
  %445 = vmatpush1.bf16.msra.mxu0 %v412
  %446 = vmatprep.subr.bf16.mxu0 %v415
  %447 = vmatpush1.bf16.msra.mxu0 %v414
  %448 = vmatprep.subr.bf16.mxu0 0
  %449 = vmatpush1.bf16.msra.mxu0 0
  %450 = vmatprep.subr.bf16.mxu0 0
  %451 = vmatpush1.bf16.msra.mxu0 0
  %452 = vmatprep.subr.bf16.mxu0 0
  %453 = vmatpush1.bf16.msra.mxu0 0
  %454 = vmatprep.subr.bf16.mxu0 0
  %455 = vmatpush1.bf16.msra.mxu0 0
  %456 = vmatprep.subr.bf16.mxu0 0
  %457 = vmatpush1.bf16.msra.mxu0 0
  %458 = vmatprep.subr.bf16.mxu0 0
  %459 = vmatpush1.bf16.msra.mxu0 0
  %460 = vmatprep.subr.bf16.mxu0 0
  %461 = vmatpush1.bf16.msra.mxu0 0
  %462 = vmatprep.subr.bf16.mxu0 0
  %463 = vmatpush1.bf16.msra.mxu0 0
  %464 = vmatprep.mubr.bf16.mxu0 0
  %465 = vmatmul.mubr.bf16.gmra.mrb[0].mxu0 %v197
  %v466 = vpop.f32.mrb[0].mxu0
  %v467 = vadd.f32 %v346, %v466
  %v468 = vpop.f32.mrb[0].mxu0
  %v469 = vadd.f32 %v348, %v468
  %v470 = vpop.f32.mrb[0].mxu0
  %v471 = vpop.f32.mrb[0].mxu0
  %472 = vdwg.mxu0
  %v473 = vld [vmem:[%s9] sm:$0x3]
  %v475 = vlaneseq
  %v476 = vshrl.u32 %v475, 7
  %v477 = vsub.s32 0, %v476
  %v478 = vrot.slane %v473, %v477
  %v479 = vlaneseq
  %v480 = vshrl.u32 %v479, 7
  %v481 = vsub.s32 1, %v480
  %v482 = vrot.slane %v473, %v481
  %v485 = vadd.f32 %v467, %v478
  %v486 = vadd.f32 %v469, %v482
  %v487 = vmax.f32 %v485, 0.0
  %v488 = vmax.f32 %v486, 0.0
  %v489 = vpack.c.bf16 %v487, %v487
  %v490 = vpack.c.bf16 %v488, %v488
  %v491 = vld [vmem:[%s10] sm:$0xff]
  %v492 = vld [vmem:[%s10 + $0x8] sm:$0xff]
  %v493 = vld [vmem:[%s10 + $0x10] sm:$0xff]
  %v494 = vld [vmem:[%s10 + $0x18] sm:$0xff]
  %v495 = vld [vmem:[%s10 + $0x20] sm:$0xff]
  %v496 = vld [vmem:[%s10 + $0x28] sm:$0xff]
  %v497 = vld [vmem:[%s10 + $0x30] sm:$0xff]
  %v498 = vld [vmem:[%s10 + $0x38] sm:$0xff]
  %v499 = vld [vmem:[%s10 + $0x40] sm:$0xff]
  %v500 = vld [vmem:[%s10 + $0x48] sm:$0xff]
  %v501 = vld [vmem:[%s10 + $0x50] sm:$0xff]
  %v502 = vld [vmem:[%s10 + $0x58] sm:$0xff]
  %v503 = vld [vmem:[%s10 + $0x60] sm:$0xff]
  %v504 = vld [vmem:[%s10 + $0x68] sm:$0xff]
  %v505 = vld [vmem:[%s10 + $0x70] sm:$0xff]
  %v506 = vld [vmem:[%s10 + $0x78] sm:$0xff]
  %v507 = vld [vmem:[%s10 + $0x80] sm:$0xff]
  %v508 = vld [vmem:[%s10 + $0x88] sm:$0xff]
  %v509 = vld [vmem:[%s10 + $0x90] sm:$0xff]
  %v510 = vld [vmem:[%s10 + $0x98] sm:$0xff]
  %v511 = vld [vmem:[%s10 + $0xa0] sm:$0xff]
  %v512 = vld [vmem:[%s10 + $0xa8] sm:$0xff]
  %v513 = vld [vmem:[%s10 + $0xb0] sm:$0xff]
  %v514 = vld [vmem:[%s10 + $0xb8] sm:$0xff]
  %v515 = vld [vmem:[%s10 + $0xc0] sm:$0xff]
  %v516 = vld [vmem:[%s10 + $0xc8] sm:$0xff]
  %v517 = vld [vmem:[%s10 + $0xd0] sm:$0xff]
  %v518 = vld [vmem:[%s10 + $0xd8] sm:$0xff]
  %v519 = vld [vmem:[%s10 + $0xe0] sm:$0xff]
  %v520 = vld [vmem:[%s10 + $0xe8] sm:$0xff]
  %v521 = vld [vmem:[%s10 + $0xf0] sm:$0xff]
  %v522 = vld [vmem:[%s10 + $0xf8] sm:$0xff]
  %v523 = vld [vmem:[%s10 + $0x100] sm:$0xff]
  %v524 = vld [vmem:[%s10 + $0x108] sm:$0xff]
  %v525 = vld [vmem:[%s10 + $0x110] sm:$0xff]
  %v526 = vld [vmem:[%s10 + $0x118] sm:$0xff]
  %v527 = vld [vmem:[%s10 + $0x120] sm:$0xff]
  %v528 = vld [vmem:[%s10 + $0x128] sm:$0xff]
  %v529 = vld [vmem:[%s10 + $0x130] sm:$0xff]
  %v530 = vld [vmem:[%s10 + $0x138] sm:$0xff]
  %v531 = vld [vmem:[%s10 + $0x140] sm:$0xff]
  %v532 = vld [vmem:[%s10 + $0x148] sm:$0xff]
  %v533 = vld [vmem:[%s10 + $0x150] sm:$0xff]
  %v534 = vld [vmem:[%s10 + $0x158] sm:$0xff]
  %v535 = vld [vmem:[%s10 + $0x160] sm:$0xff]
  %v536 = vld [vmem:[%s10 + $0x168] sm:$0xff]
  %v537 = vld [vmem:[%s10 + $0x170] sm:$0xff]
  %v538 = vld [vmem:[%s10 + $0x178] sm:$0xff]
  %v539 = vld [vmem:[%s10 + $0x180] sm:$0xff]
  %v540 = vld [vmem:[%s10 + $0x188] sm:$0xff]
  %v541 = vld [vmem:[%s10 + $0x190] sm:$0xff]
  %v542 = vld [vmem:[%s10 + $0x198] sm:$0xff]
  %v543 = vld [vmem:[%s10 + $0x1a0] sm:$0xff]
  %v544 = vld [vmem:[%s10 + $0x1a8] sm:$0xff]
  %v545 = vld [vmem:[%s10 + $0x1b0] sm:$0xff]
  %v546 = vld [vmem:[%s10 + $0x1b8] sm:$0xff]
  %v547 = vld [vmem:[%s10 + $0x1c0] sm:$0xff]
  %v548 = vld [vmem:[%s10 + $0x1c8] sm:$0xff]
  %v549 = vld [vmem:[%s10 + $0x1d0] sm:$0xff]
  %v550 = vld [vmem:[%s10 + $0x1d8] sm:$0xff]
  %v551 = vld [vmem:[%s10 + $0x1e0] sm:$0xff]
  %v552 = vld [vmem:[%s10 + $0x1e8] sm:$0xff]
  %v553 = vld [vmem:[%s10 + $0x1f0] sm:$0xff]
  %v554 = vld [vmem:[%s10 + $0x1f8] sm:$0xff]
  %v555 = vld [vmem:[%s10 + $0x200] sm:$0xff]
  %v556 = vld [vmem:[%s10 + $0x208] sm:$0xff]
  %v557 = vld [vmem:[%s10 + $0x210] sm:$0xff]
  %v558 = vld [vmem:[%s10 + $0x218] sm:$0xff]
  %v559 = vld [vmem:[%s10 + $0x220] sm:$0xff]
  %v560 = vld [vmem:[%s10 + $0x228] sm:$0xff]
  %v561 = vld [vmem:[%s10 + $0x230] sm:$0xff]
  %v562 = vld [vmem:[%s10 + $0x238] sm:$0xff]
  %v563 = vld [vmem:[%s10 + $0x240] sm:$0xff]
  %v564 = vld [vmem:[%s10 + $0x248] sm:$0xff]
  %v565 = vld [vmem:[%s10 + $0x250] sm:$0xff]
  %v566 = vld [vmem:[%s10 + $0x258] sm:$0xff]
  %v567 = vld [vmem:[%s10 + $0x260] sm:$0xff]
  %v568 = vld [vmem:[%s10 + $0x268] sm:$0xff]
  %v569 = vld [vmem:[%s10 + $0x270] sm:$0xff]
  %v570 = vld [vmem:[%s10 + $0x278] sm:$0xff]
  %v571 = vld [vmem:[%s10 + $0x280] sm:$0xff]
  %v572 = vld [vmem:[%s10 + $0x288] sm:$0xff]
  %v573 = vld [vmem:[%s10 + $0x290] sm:$0xff]
  %v574 = vld [vmem:[%s10 + $0x298] sm:$0xff]
  %v575 = vld [vmem:[%s10 + $0x2a0] sm:$0xff]
  %v576 = vld [vmem:[%s10 + $0x2a8] sm:$0xff]
  %v577 = vld [vmem:[%s10 + $0x2b0] sm:$0xff]
  %v578 = vld [vmem:[%s10 + $0x2b8] sm:$0xff]
  %v579 = vld [vmem:[%s10 + $0x2c0] sm:$0xff]
  %v580 = vld [vmem:[%s10 + $0x2c8] sm:$0xff]
  %v581 = vld [vmem:[%s10 + $0x2d0] sm:$0xff]
  %v582 = vld [vmem:[%s10 + $0x2d8] sm:$0xff]
  %v583 = vld [vmem:[%s10 + $0x2e0] sm:$0xff]
  %v584 = vld [vmem:[%s10 + $0x2e8] sm:$0xff]
  %v585 = vld [vmem:[%s10 + $0x2f0] sm:$0xff]
  %v586 = vld [vmem:[%s10 + $0x2f8] sm:$0xff]
  %v587 = vld [vmem:[%s10 + $0x300] sm:$0xff]
  %v588 = vld [vmem:[%s10 + $0x308] sm:$0xff]
  %v589 = vld [vmem:[%s10 + $0x310] sm:$0xff]
  %v590 = vld [vmem:[%s10 + $0x318] sm:$0xff]
  %v591 = vld [vmem:[%s10 + $0x320] sm:$0xff]
  %v592 = vld [vmem:[%s10 + $0x328] sm:$0xff]
  %v593 = vld [vmem:[%s10 + $0x330] sm:$0xff]
  %v594 = vld [vmem:[%s10 + $0x338] sm:$0xff]
  %v595 = vld [vmem:[%s10 + $0x340] sm:$0xff]
  %v596 = vld [vmem:[%s10 + $0x348] sm:$0xff]
  %v597 = vld [vmem:[%s10 + $0x350] sm:$0xff]
  %v598 = vld [vmem:[%s10 + $0x358] sm:$0xff]
  %v599 = vld [vmem:[%s10 + $0x360] sm:$0xff]
  %v600 = vld [vmem:[%s10 + $0x368] sm:$0xff]
  %v601 = vld [vmem:[%s10 + $0x370] sm:$0xff]
  %v602 = vld [vmem:[%s10 + $0x378] sm:$0xff]
  %v603 = vld [vmem:[%s10 + $0x380] sm:$0xff]
  %v604 = vld [vmem:[%s10 + $0x388] sm:$0xff]
  %v605 = vld [vmem:[%s10 + $0x390] sm:$0xff]
  %v606 = vld [vmem:[%s10 + $0x398] sm:$0xff]
  %v607 = vld [vmem:[%s10 + $0x3a0] sm:$0xff]
  %v608 = vld [vmem:[%s10 + $0x3a8] sm:$0xff]
  %v609 = vld [vmem:[%s10 + $0x3b0] sm:$0xff]
  %v610 = vld [vmem:[%s10 + $0x3b8] sm:$0xff]
  %v611 = vld [vmem:[%s10 + $0x3c0] sm:$0xff]
  %v612 = vld [vmem:[%s10 + $0x3c8] sm:$0xff]
  %v613 = vld [vmem:[%s10 + $0x3d0] sm:$0xff]
  %v614 = vld [vmem:[%s10 + $0x3d8] sm:$0xff]
  %v615 = vld [vmem:[%s10 + $0x3e0] sm:$0xff]
  %v616 = vld [vmem:[%s10 + $0x3e8] sm:$0xff]
  %v617 = vld [vmem:[%s10 + $0x3f0] sm:$0xff]
  %v618 = vld [vmem:[%s10 + $0x3f8] sm:$0xff]
  %v619 = vld [vmem:[%s2] sm:$0xff]
  %v620 = vld [vmem:[%s2 + $0x8] sm:$0xff]
  %v621 = vpack.c.bf16 %v619, %v619
  %v622 = vpack.c.bf16 %v620, %v620
  %v623 = vld [vmem:[%s10 + $0x400] sm:$0xff]
  %v624 = vld [vmem:[%s10 + $0x408] sm:$0xff]
  %v625 = vld [vmem:[%s10 + $0x410] sm:$0xff]
  %v626 = vld [vmem:[%s10 + $0x418] sm:$0xff]
  %v627 = vld [vmem:[%s10 + $0x420] sm:$0xff]
  %v628 = vld [vmem:[%s10 + $0x428] sm:$0xff]
  %v629 = vld [vmem:[%s10 + $0x430] sm:$0xff]
  %v630 = vld [vmem:[%s10 + $0x438] sm:$0xff]
  %v631 = vld [vmem:[%s10 + $0x440] sm:$0xff]
  %v632 = vld [vmem:[%s10 + $0x448] sm:$0xff]
  %v633 = vld [vmem:[%s10 + $0x450] sm:$0xff]
  %v634 = vld [vmem:[%s10 + $0x458] sm:$0xff]
  %v635 = vld [vmem:[%s10 + $0x460] sm:$0xff]
  %v636 = vld [vmem:[%s10 + $0x468] sm:$0xff]
  %v637 = vld [vmem:[%s10 + $0x470] sm:$0xff]
  %v638 = vld [vmem:[%s10 + $0x478] sm:$0xff]
  %v639 = vld [vmem:[%s10 + $0x480] sm:$0xff]
  %v640 = vld [vmem:[%s10 + $0x488] sm:$0xff]
  %v641 = vld [vmem:[%s10 + $0x490] sm:$0xff]
  %v642 = vld [vmem:[%s10 + $0x498] sm:$0xff]
  %v643 = vld [vmem:[%s10 + $0x4a0] sm:$0xff]
  %v644 = vld [vmem:[%s10 + $0x4a8] sm:$0xff]
  %v645 = vld [vmem:[%s10 + $0x4b0] sm:$0xff]
  %v646 = vld [vmem:[%s10 + $0x4b8] sm:$0xff]
  %v647 = vld [vmem:[%s10 + $0x4c0] sm:$0xff]
  %v648 = vld [vmem:[%s10 + $0x4c8] sm:$0xff]
  %v649 = vld [vmem:[%s10 + $0x4d0] sm:$0xff]
  %v650 = vld [vmem:[%s10 + $0x4d8] sm:$0xff]
  %v651 = vld [vmem:[%s10 + $0x4e0] sm:$0xff]
  %v652 = vld [vmem:[%s10 + $0x4e8] sm:$0xff]
  %v653 = vld [vmem:[%s10 + $0x4f0] sm:$0xff]
  %v654 = vld [vmem:[%s10 + $0x4f8] sm:$0xff]
  %v655 = vld [vmem:[%s10 + $0x500] sm:$0xff]
  %v656 = vld [vmem:[%s10 + $0x508] sm:$0xff]
  %v657 = vld [vmem:[%s10 + $0x510] sm:$0xff]
  %v658 = vld [vmem:[%s10 + $0x518] sm:$0xff]
  %v659 = vld [vmem:[%s10 + $0x520] sm:$0xff]
  %v660 = vld [vmem:[%s10 + $0x528] sm:$0xff]
  %v661 = vld [vmem:[%s10 + $0x530] sm:$0xff]
  %v662 = vld [vmem:[%s10 + $0x538] sm:$0xff]
  %v663 = vld [vmem:[%s10 + $0x540] sm:$0xff]
  %v664 = vld [vmem:[%s10 + $0x548] sm:$0xff]
  %v665 = vld [vmem:[%s10 + $0x550] sm:$0xff]
  %v666 = vld [vmem:[%s10 + $0x558] sm:$0xff]
  %v667 = vld [vmem:[%s10 + $0x560] sm:$0xff]
  %v668 = vld [vmem:[%s10 + $0x568] sm:$0xff]
  %v669 = vld [vmem:[%s10 + $0x570] sm:$0xff]
  %v670 = vld [vmem:[%s10 + $0x578] sm:$0xff]
  %v671 = vld [vmem:[%s10 + $0x580] sm:$0xff]
  %v672 = vld [vmem:[%s10 + $0x588] sm:$0xff]
  %v673 = vld [vmem:[%s10 + $0x590] sm:$0xff]
  %v674 = vld [vmem:[%s10 + $0x598] sm:$0xff]
  %v675 = vld [vmem:[%s10 + $0x5a0] sm:$0xff]
  %v676 = vld [vmem:[%s10 + $0x5a8] sm:$0xff]
  %v677 = vld [vmem:[%s10 + $0x5b0] sm:$0xff]
  %v678 = vld [vmem:[%s10 + $0x5b8] sm:$0xff]
  %v679 = vld [vmem:[%s10 + $0x5c0] sm:$0xff]
  %v680 = vld [vmem:[%s10 + $0x5c8] sm:$0xff]
  %v681 = vld [vmem:[%s10 + $0x5d0] sm:$0xff]
  %v682 = vld [vmem:[%s10 + $0x5d8] sm:$0xff]
  %v683 = vld [vmem:[%s10 + $0x5e0] sm:$0xff]
  %v684 = vld [vmem:[%s10 + $0x5e8] sm:$0xff]
  %v685 = vld [vmem:[%s10 + $0x5f0] sm:$0xff]
  %v686 = vld [vmem:[%s10 + $0x5f8] sm:$0xff]
  %v687 = vld [vmem:[%s10 + $0x600] sm:$0xff]
  %v688 = vld [vmem:[%s10 + $0x608] sm:$0xff]
  %v689 = vld [vmem:[%s10 + $0x610] sm:$0xff]
  %v690 = vld [vmem:[%s10 + $0x618] sm:$0xff]
  %v691 = vld [vmem:[%s10 + $0x620] sm:$0xff]
  %v692 = vld [vmem:[%s10 + $0x628] sm:$0xff]
  %v693 = vld [vmem:[%s10 + $0x630] sm:$0xff]
  %v694 = vld [vmem:[%s10 + $0x638] sm:$0xff]
  %v695 = vld [vmem:[%s10 + $0x640] sm:$0xff]
  %v696 = vld [vmem:[%s10 + $0x648] sm:$0xff]
  %v697 = vld [vmem:[%s10 + $0x650] sm:$0xff]
  %v698 = vld [vmem:[%s10 + $0x658] sm:$0xff]
  %v699 = vld [vmem:[%s10 + $0x660] sm:$0xff]
  %v700 = vld [vmem:[%s10 + $0x668] sm:$0xff]
  %v701 = vld [vmem:[%s10 + $0x670] sm:$0xff]
  %v702 = vld [vmem:[%s10 + $0x678] sm:$0xff]
  %v703 = vld [vmem:[%s10 + $0x680] sm:$0xff]
  %v704 = vld [vmem:[%s10 + $0x688] sm:$0xff]
  %v705 = vld [vmem:[%s10 + $0x690] sm:$0xff]
  %v706 = vld [vmem:[%s10 + $0x698] sm:$0xff]
  %v707 = vld [vmem:[%s10 + $0x6a0] sm:$0xff]
  %v708 = vld [vmem:[%s10 + $0x6a8] sm:$0xff]
  %v709 = vld [vmem:[%s10 + $0x6b0] sm:$0xff]
  %v710 = vld [vmem:[%s10 + $0x6b8] sm:$0xff]
  %v711 = vld [vmem:[%s10 + $0x6c0] sm:$0xff]
  %v712 = vld [vmem:[%s10 + $0x6c8] sm:$0xff]
  %v713 = vld [vmem:[%s10 + $0x6d0] sm:$0xff]
  %v714 = vld [vmem:[%s10 + $0x6d8] sm:$0xff]
  %v715 = vld [vmem:[%s10 + $0x6e0] sm:$0xff]
  %v716 = vld [vmem:[%s10 + $0x6e8] sm:$0xff]
  %v717 = vld [vmem:[%s10 + $0x6f0] sm:$0xff]
  %v718 = vld [vmem:[%s10 + $0x6f8] sm:$0xff]
  %v719 = vld [vmem:[%s10 + $0x700] sm:$0xff]
  %v720 = vld [vmem:[%s10 + $0x708] sm:$0xff]
  %v721 = vld [vmem:[%s10 + $0x710] sm:$0xff]
  %v722 = vld [vmem:[%s10 + $0x718] sm:$0xff]
  %v723 = vld [vmem:[%s10 + $0x720] sm:$0xff]
  %v724 = vld [vmem:[%s10 + $0x728] sm:$0xff]
  %v725 = vld [vmem:[%s10 + $0x730] sm:$0xff]
  %v726 = vld [vmem:[%s10 + $0x738] sm:$0xff]
  %v727 = vld [vmem:[%s10 + $0x740] sm:$0xff]
  %v728 = vld [vmem:[%s10 + $0x748] sm:$0xff]
  %v729 = vld [vmem:[%s10 + $0x750] sm:$0xff]
  %v730 = vld [vmem:[%s10 + $0x758] sm:$0xff]
  %v731 = vld [vmem:[%s10 + $0x760] sm:$0xff]
  %v732 = vld [vmem:[%s10 + $0x768] sm:$0xff]
  %v733 = vld [vmem:[%s10 + $0x770] sm:$0xff]
  %v734 = vld [vmem:[%s10 + $0x778] sm:$0xff]
  %v735 = vld [vmem:[%s10 + $0x780] sm:$0xff]
  %v736 = vld [vmem:[%s10 + $0x788] sm:$0xff]
  %v737 = vld [vmem:[%s10 + $0x790] sm:$0xff]
  %v738 = vld [vmem:[%s10 + $0x798] sm:$0xff]
  %v739 = vld [vmem:[%s10 + $0x7a0] sm:$0xff]
  %v740 = vld [vmem:[%s10 + $0x7a8] sm:$0xff]
  %v741 = vld [vmem:[%s10 + $0x7b0] sm:$0xff]
  %v742 = vld [vmem:[%s10 + $0x7b8] sm:$0xff]
  %v743 = vld [vmem:[%s10 + $0x7c0] sm:$0xff]
  %v744 = vld [vmem:[%s10 + $0x7c8] sm:$0xff]
  %v745 = vld [vmem:[%s10 + $0x7d0] sm:$0xff]
  %v746 = vld [vmem:[%s10 + $0x7d8] sm:$0xff]
  %v747 = vld [vmem:[%s10 + $0x7e0] sm:$0xff]
  %v748 = vld [vmem:[%s10 + $0x7e8] sm:$0xff]
  %v749 = vld [vmem:[%s10 + $0x7f0] sm:$0xff]
  %v750 = vld [vmem:[%s10 + $0x7f8] sm:$0xff]
  %v879 = vunpack.c.l.b16 %v623
  %v880 = vunpack.c.h.b16 %v623
  %v881 = vunpack.c.l.b16 %v624
  %v882 = vunpack.c.h.b16 %v624
  %v883 = vunpack.c.l.b16 %v625
  %v884 = vunpack.c.h.b16 %v625
  %v885 = vunpack.c.l.b16 %v626
  %v886 = vunpack.c.h.b16 %v626
  %v887 = vunpack.c.l.b16 %v627
  %v888 = vunpack.c.h.b16 %v627
  %v889 = vunpack.c.l.b16 %v628
  %v890 = vunpack.c.h.b16 %v628
  %v891 = vunpack.c.l.b16 %v629
  %v892 = vunpack.c.h.b16 %v629
  %v893 = vunpack.c.l.b16 %v630
  %v894 = vunpack.c.h.b16 %v630
  %v895 = vunpack.c.l.b16 %v631
  %v896 = vunpack.c.h.b16 %v631
  %v897 = vunpack.c.l.b16 %v632
  %v898 = vunpack.c.h.b16 %v632
  %v899 = vunpack.c.l.b16 %v633
  %v900 = vunpack.c.h.b16 %v633
  %v901 = vunpack.c.l.b16 %v634
  %v902 = vunpack.c.h.b16 %v634
  %v903 = vunpack.c.l.b16 %v635
  %v904 = vunpack.c.h.b16 %v635
  %v905 = vunpack.c.l.b16 %v636
  %v906 = vunpack.c.h.b16 %v636
  %v907 = vunpack.c.l.b16 %v637
  %v908 = vunpack.c.h.b16 %v637
  %v909 = vunpack.c.l.b16 %v638
  %v910 = vunpack.c.h.b16 %v638
  %v911 = vunpack.c.l.b16 %v639
  %v912 = vunpack.c.h.b16 %v639
  %v913 = vunpack.c.l.b16 %v640
  %v914 = vunpack.c.h.b16 %v640
  %v915 = vunpack.c.l.b16 %v641
  %v916 = vunpack.c.h.b16 %v641
  %v917 = vunpack.c.l.b16 %v642
  %v918 = vunpack.c.h.b16 %v642
  %v919 = vunpack.c.l.b16 %v643
  %v920 = vunpack.c.h.b16 %v643
  %v921 = vunpack.c.l.b16 %v644
  %v922 = vunpack.c.h.b16 %v644
  %v923 = vunpack.c.l.b16 %v645
  %v924 = vunpack.c.h.b16 %v645
  %v925 = vunpack.c.l.b16 %v646
  %v926 = vunpack.c.h.b16 %v646
  %v927 = vunpack.c.l.b16 %v647
  %v928 = vunpack.c.h.b16 %v647
  %v929 = vunpack.c.l.b16 %v648
  %v930 = vunpack.c.h.b16 %v648
  %v931 = vunpack.c.l.b16 %v649
  %v932 = vunpack.c.h.b16 %v649
  %v933 = vunpack.c.l.b16 %v650
  %v934 = vunpack.c.h.b16 %v650
  %v935 = vunpack.c.l.b16 %v651
  %v936 = vunpack.c.h.b16 %v651
  %v937 = vunpack.c.l.b16 %v652
  %v938 = vunpack.c.h.b16 %v652
  %v939 = vunpack.c.l.b16 %v653
  %v940 = vunpack.c.h.b16 %v653
  %v941 = vunpack.c.l.b16 %v654
  %v942 = vunpack.c.h.b16 %v654
  %v943 = vunpack.c.l.b16 %v655
  %v944 = vunpack.c.h.b16 %v655
  %v945 = vunpack.c.l.b16 %v656
  %v946 = vunpack.c.h.b16 %v656
  %v947 = vunpack.c.l.b16 %v657
  %v948 = vunpack.c.h.b16 %v657
  %v949 = vunpack.c.l.b16 %v658
  %v950 = vunpack.c.h.b16 %v658
  %v951 = vunpack.c.l.b16 %v659
  %v952 = vunpack.c.h.b16 %v659
  %v953 = vunpack.c.l.b16 %v660
  %v954 = vunpack.c.h.b16 %v660
  %v955 = vunpack.c.l.b16 %v661
  %v956 = vunpack.c.h.b16 %v661
  %v957 = vunpack.c.l.b16 %v662
  %v958 = vunpack.c.h.b16 %v662
  %v959 = vunpack.c.l.b16 %v663
  %v960 = vunpack.c.h.b16 %v663
  %v961 = vunpack.c.l.b16 %v664
  %v962 = vunpack.c.h.b16 %v664
  %v963 = vunpack.c.l.b16 %v665
  %v964 = vunpack.c.h.b16 %v665
  %v965 = vunpack.c.l.b16 %v666
  %v966 = vunpack.c.h.b16 %v666
  %v967 = vunpack.c.l.b16 %v667
  %v968 = vunpack.c.h.b16 %v667
  %v969 = vunpack.c.l.b16 %v668
  %v970 = vunpack.c.h.b16 %v668
  %v971 = vunpack.c.l.b16 %v669
  %v972 = vunpack.c.h.b16 %v669
  %v973 = vunpack.c.l.b16 %v670
  %v974 = vunpack.c.h.b16 %v670
  %v975 = vunpack.c.l.b16 %v671
  %v976 = vunpack.c.h.b16 %v671
  %v977 = vunpack.c.l.b16 %v672
  %v978 = vunpack.c.h.b16 %v672
  %v979 = vunpack.c.l.b16 %v673
  %v980 = vunpack.c.h.b16 %v673
  %v981 = vunpack.c.l.b16 %v674
  %v982 = vunpack.c.h.b16 %v674
  %v983 = vunpack.c.l.b16 %v675
  %v984 = vunpack.c.h.b16 %v675
  %v985 = vunpack.c.l.b16 %v676
  %v986 = vunpack.c.h.b16 %v676
  %v987 = vunpack.c.l.b16 %v677
  %v988 = vunpack.c.h.b16 %v677
  %v989 = vunpack.c.l.b16 %v678
  %v990 = vunpack.c.h.b16 %v678
  %v991 = vunpack.c.l.b16 %v679
  %v992 = vunpack.c.h.b16 %v679
  %v993 = vunpack.c.l.b16 %v680
  %v994 = vunpack.c.h.b16 %v680
  %v995 = vunpack.c.l.b16 %v681
  %v996 = vunpack.c.h.b16 %v681
  %v997 = vunpack.c.l.b16 %v682
  %v998 = vunpack.c.h.b16 %v682
  %v999 = vunpack.c.l.b16 %v683
  %v1000 = vunpack.c.h.b16 %v683
  %v1001 = vunpack.c.l.b16 %v684
  %v1002 = vunpack.c.h.b16 %v684
  %v1003 = vunpack.c.l.b16 %v685
  %v1004 = vunpack.c.h.b16 %v685
  %v1005 = vunpack.c.l.b16 %v686
  %v1006 = vunpack.c.h.b16 %v686
  %v1007 = vunpack.c.l.b16 %v687
  %v1008 = vunpack.c.h.b16 %v687
  %v1009 = vunpack.c.l.b16 %v688
  %v1010 = vunpack.c.h.b16 %v688
  %v1011 = vunpack.c.l.b16 %v689
  %v1012 = vunpack.c.h.b16 %v689
  %v1013 = vunpack.c.l.b16 %v690
  %v1014 = vunpack.c.h.b16 %v690
  %v1015 = vunpack.c.l.b16 %v691
  %v1016 = vunpack.c.h.b16 %v691
  %v1017 = vunpack.c.l.b16 %v692
  %v1018 = vunpack.c.h.b16 %v692
  %v1019 = vunpack.c.l.b16 %v693
  %v1020 = vunpack.c.h.b16 %v693
  %v1021 = vunpack.c.l.b16 %v694
  %v1022 = vunpack.c.h.b16 %v694
  %v1023 = vunpack.c.l.b16 %v695
  %v1024 = vunpack.c.h.b16 %v695
  %v1025 = vunpack.c.l.b16 %v696
  %v1026 = vunpack.c.h.b16 %v696
  %v1027 = vunpack.c.l.b16 %v697
  %v1028 = vunpack.c.h.b16 %v697
  %v1029 = vunpack.c.l.b16 %v698
  %v1030 = vunpack.c.h.b16 %v698
  %v1031 = vunpack.c.l.b16 %v699
  %v1032 = vunpack.c.h.b16 %v699
  %v1033 = vunpack.c.l.b16 %v700
  %v1034 = vunpack.c.h.b16 %v700
  %v1035 = vunpack.c.l.b16 %v701
  %v1036 = vunpack.c.h.b16 %v701
  %v1037 = vunpack.c.l.b16 %v702
  %v1038 = vunpack.c.h.b16 %v702
  %v1039 = vunpack.c.l.b16 %v703
  %v1040 = vunpack.c.h.b16 %v703
  %v1041 = vunpack.c.l.b16 %v704
  %v1042 = vunpack.c.h.b16 %v704
  %v1043 = vunpack.c.l.b16 %v705
  %v1044 = vunpack.c.h.b16 %v705
  %v1045 = vunpack.c.l.b16 %v706
  %v1046 = vunpack.c.h.b16 %v706
  %v1047 = vunpack.c.l.b16 %v707
  %v1048 = vunpack.c.h.b16 %v707
  %v1049 = vunpack.c.l.b16 %v708
  %v1050 = vunpack.c.h.b16 %v708
  %v1051 = vunpack.c.l.b16 %v709
  %v1052 = vunpack.c.h.b16 %v709
  %v1053 = vunpack.c.l.b16 %v710
  %v1054 = vunpack.c.h.b16 %v710
  %v1055 = vunpack.c.l.b16 %v711
  %v1056 = vunpack.c.h.b16 %v711
  %v1057 = vunpack.c.l.b16 %v712
  %v1058 = vunpack.c.h.b16 %v712
  %v1059 = vunpack.c.l.b16 %v713
  %v1060 = vunpack.c.h.b16 %v713
  %v1061 = vunpack.c.l.b16 %v714
  %v1062 = vunpack.c.h.b16 %v714
  %v1063 = vunpack.c.l.b16 %v715
  %v1064 = vunpack.c.h.b16 %v715
  %v1065 = vunpack.c.l.b16 %v716
  %v1066 = vunpack.c.h.b16 %v716
  %v1067 = vunpack.c.l.b16 %v717
  %v1068 = vunpack.c.h.b16 %v717
  %v1069 = vunpack.c.l.b16 %v718
  %v1070 = vunpack.c.h.b16 %v718
  %v1071 = vunpack.c.l.b16 %v719
  %v1072 = vunpack.c.h.b16 %v719
  %v1073 = vunpack.c.l.b16 %v720
  %v1074 = vunpack.c.h.b16 %v720
  %v1075 = vunpack.c.l.b16 %v721
  %v1076 = vunpack.c.h.b16 %v721
  %v1077 = vunpack.c.l.b16 %v722
  %v1078 = vunpack.c.h.b16 %v722
  %v1079 = vunpack.c.l.b16 %v723
  %v1080 = vunpack.c.h.b16 %v723
  %v1081 = vunpack.c.l.b16 %v724
  %v1082 = vunpack.c.h.b16 %v724
  %v1083 = vunpack.c.l.b16 %v725
  %v1084 = vunpack.c.h.b16 %v725
  %v1085 = vunpack.c.l.b16 %v726
  %v1086 = vunpack.c.h.b16 %v726
  %v1087 = vunpack.c.l.b16 %v727
  %v1088 = vunpack.c.h.b16 %v727
  %v1089 = vunpack.c.l.b16 %v728
  %v1090 = vunpack.c.h.b16 %v728
  %v1091 = vunpack.c.l.b16 %v729
  %v1092 = vunpack.c.h.b16 %v729
  %v1093 = vunpack.c.l.b16 %v730
  %v1094 = vunpack.c.h.b16 %v730
  %v1095 = vunpack.c.l.b16 %v731
  %v1096 = vunpack.c.h.b16 %v731
  %v1097 = vunpack.c.l.b16 %v732
  %v1098 = vunpack.c.h.b16 %v732
  %v1099 = vunpack.c.l.b16 %v733
  %v1100 = vunpack.c.h.b16 %v733
  %v1101 = vunpack.c.l.b16 %v734
  %v1102 = vunpack.c.h.b16 %v734
  %v1103 = vunpack.c.l.b16 %v735
  %v1104 = vunpack.c.h.b16 %v735
  %v1105 = vunpack.c.l.b16 %v736
  %v1106 = vunpack.c.h.b16 %v736
  %v1107 = vunpack.c.l.b16 %v737
  %v1108 = vunpack.c.h.b16 %v737
  %v1109 = vunpack.c.l.b16 %v738
  %v1110 = vunpack.c.h.b16 %v738
  %v1111 = vunpack.c.l.b16 %v739
  %v1112 = vunpack.c.h.b16 %v739
  %v1113 = vunpack.c.l.b16 %v740
  %v1114 = vunpack.c.h.b16 %v740
  %v1115 = vunpack.c.l.b16 %v741
  %v1116 = vunpack.c.h.b16 %v741
  %v1117 = vunpack.c.l.b16 %v742
  %v1118 = vunpack.c.h.b16 %v742
  %v1119 = vunpack.c.l.b16 %v743
  %v1120 = vunpack.c.h.b16 %v743
  %v1121 = vunpack.c.l.b16 %v744
  %v1122 = vunpack.c.h.b16 %v744
  %v1123 = vunpack.c.l.b16 %v745
  %v1124 = vunpack.c.h.b16 %v745
  %v1125 = vunpack.c.l.b16 %v746
  %v1126 = vunpack.c.h.b16 %v746
  %v1127 = vunpack.c.l.b16 %v747
  %v1128 = vunpack.c.h.b16 %v747
  %v1129 = vunpack.c.l.b16 %v748
  %v1130 = vunpack.c.h.b16 %v748
  %v1131 = vunpack.c.l.b16 %v749
  %v1132 = vunpack.c.h.b16 %v749
  %v1133 = vunpack.c.l.b16 %v750
  %v1134 = vunpack.c.h.b16 %v750
  %v1135 = vpack.c.b16 %v887, %v879
  %v1136 = vpack.c.b16 %v888, %v880
  %v1137 = vpack.c.b16 %v889, %v881
  %v1138 = vpack.c.b16 %v890, %v882
  %v1139 = vpack.c.b16 %v891, %v883
  %v1140 = vpack.c.b16 %v892, %v884
  %v1141 = vpack.c.b16 %v893, %v885
  %v1142 = vpack.c.b16 %v894, %v886
  %v1143 = vpack.c.b16 %v903, %v895
  %v1144 = vpack.c.b16 %v904, %v896
  %v1145 = vpack.c.b16 %v905, %v897
  %v1146 = vpack.c.b16 %v906, %v898
  %v1147 = vpack.c.b16 %v907, %v899
  %v1148 = vpack.c.b16 %v908, %v900
  %v1149 = vpack.c.b16 %v909, %v901
  %v1150 = vpack.c.b16 %v910, %v902
  %v1151 = vpack.c.b16 %v919, %v911
  %v1152 = vpack.c.b16 %v920, %v912
  %v1153 = vpack.c.b16 %v921, %v913
  %v1154 = vpack.c.b16 %v922, %v914
  %v1155 = vpack.c.b16 %v923, %v915
  %v1156 = vpack.c.b16 %v924, %v916
  %v1157 = vpack.c.b16 %v925, %v917
  %v1158 = vpack.c.b16 %v926, %v918
  %v1159 = vpack.c.b16 %v935, %v927
  %v1160 = vpack.c.b16 %v936, %v928
  %v1161 = vpack.c.b16 %v937, %v929
  %v1162 = vpack.c.b16 %v938, %v930
  %v1163 = vpack.c.b16 %v939, %v931
  %v1164 = vpack.c.b16 %v940, %v932
  %v1165 = vpack.c.b16 %v941, %v933
  %v1166 = vpack.c.b16 %v942, %v934
  %v1167 = vpack.c.b16 %v951, %v943
  %v1168 = vpack.c.b16 %v952, %v944
  %v1169 = vpack.c.b16 %v953, %v945
  %v1170 = vpack.c.b16 %v954, %v946
  %v1171 = vpack.c.b16 %v955, %v947
  %v1172 = vpack.c.b16 %v956, %v948
  %v1173 = vpack.c.b16 %v957, %v949
  %v1174 = vpack.c.b16 %v958, %v950
  %v1175 = vpack.c.b16 %v967, %v959
  %v1176 = vpack.c.b16 %v968, %v960
  %v1177 = vpack.c.b16 %v969, %v961
  %v1178 = vpack.c.b16 %v970, %v962
  %v1179 = vpack.c.b16 %v971, %v963
  %v1180 = vpack.c.b16 %v972, %v964
  %v1181 = vpack.c.b16 %v973, %v965
  %v1182 = vpack.c.b16 %v974, %v966
  %v1183 = vpack.c.b16 %v983, %v975
  %v1184 = vpack.c.b16 %v984, %v976
  %v1185 = vpack.c.b16 %v985, %v977
  %v1186 = vpack.c.b16 %v986, %v978
  %v1187 = vpack.c.b16 %v987, %v979
  %v1188 = vpack.c.b16 %v988, %v980
  %v1189 = vpack.c.b16 %v989, %v981
  %v1190 = vpack.c.b16 %v990, %v982
  %v1191 = vpack.c.b16 %v999, %v991
  %v1192 = vpack.c.b16 %v1000, %v992
  %v1193 = vpack.c.b16 %v1001, %v993
  %v1194 = vpack.c.b16 %v1002, %v994
  %v1195 = vpack.c.b16 %v1003, %v995
  %v1196 = vpack.c.b16 %v1004, %v996
  %v1197 = vpack.c.b16 %v1005, %v997
  %v1198 = vpack.c.b16 %v1006, %v998
  %v1199 = vpack.c.b16 %v1015, %v1007
  %v1200 = vpack.c.b16 %v1016, %v1008
  %v1201 = vpack.c.b16 %v1017, %v1009
  %v1202 = vpack.c.b16 %v1018, %v1010
  %v1203 = vpack.c.b16 %v1019, %v1011
  %v1204 = vpack.c.b16 %v1020, %v1012
  %v1205 = vpack.c.b16 %v1021, %v1013
  %v1206 = vpack.c.b16 %v1022, %v1014
  %v1207 = vpack.c.b16 %v1031, %v1023
  %v1208 = vpack.c.b16 %v1032, %v1024
  %v1209 = vpack.c.b16 %v1033, %v1025
  %v1210 = vpack.c.b16 %v1034, %v1026
  %v1211 = vpack.c.b16 %v1035, %v1027
  %v1212 = vpack.c.b16 %v1036, %v1028
  %v1213 = vpack.c.b16 %v1037, %v1029
  %v1214 = vpack.c.b16 %v1038, %v1030
  %v1215 = vpack.c.b16 %v1047, %v1039
  %v1216 = vpack.c.b16 %v1048, %v1040
  %v1217 = vpack.c.b16 %v1049, %v1041
  %v1218 = vpack.c.b16 %v1050, %v1042
  %v1219 = vpack.c.b16 %v1051, %v1043
  %v1220 = vpack.c.b16 %v1052, %v1044
  %v1221 = vpack.c.b16 %v1053, %v1045
  %v1222 = vpack.c.b16 %v1054, %v1046
  %v1223 = vpack.c.b16 %v1063, %v1055
  %v1224 = vpack.c.b16 %v1064, %v1056
  %v1225 = vpack.c.b16 %v1065, %v1057
  %v1226 = vpack.c.b16 %v1066, %v1058
  %v1227 = vpack.c.b16 %v1067, %v1059
  %v1228 = vpack.c.b16 %v1068, %v1060
  %v1229 = vpack.c.b16 %v1069, %v1061
  %v1230 = vpack.c.b16 %v1070, %v1062
  %v1231 = vpack.c.b16 %v1079, %v1071
  %v1232 = vpack.c.b16 %v1080, %v1072
  %v1233 = vpack.c.b16 %v1081, %v1073
  %v1234 = vpack.c.b16 %v1082, %v1074
  %v1235 = vpack.c.b16 %v1083, %v1075
  %v1236 = vpack.c.b16 %v1084, %v1076
  %v1237 = vpack.c.b16 %v1085, %v1077
  %v1238 = vpack.c.b16 %v1086, %v1078
  %v1239 = vpack.c.b16 %v1095, %v1087
  %v1240 = vpack.c.b16 %v1096, %v1088
  %v1241 = vpack.c.b16 %v1097, %v1089
  %v1242 = vpack.c.b16 %v1098, %v1090
  %v1243 = vpack.c.b16 %v1099, %v1091
  %v1244 = vpack.c.b16 %v1100, %v1092
  %v1245 = vpack.c.b16 %v1101, %v1093
  %v1246 = vpack.c.b16 %v1102, %v1094
  %v1247 = vpack.c.b16 %v1111, %v1103
  %v1248 = vpack.c.b16 %v1112, %v1104
  %v1249 = vpack.c.b16 %v1113, %v1105
  %v1250 = vpack.c.b16 %v1114, %v1106
  %v1251 = vpack.c.b16 %v1115, %v1107
  %v1252 = vpack.c.b16 %v1116, %v1108
  %v1253 = vpack.c.b16 %v1117, %v1109
  %v1254 = vpack.c.b16 %v1118, %v1110
  %v1255 = vpack.c.b16 %v1127, %v1119
  %v1256 = vpack.c.b16 %v1128, %v1120
  %v1257 = vpack.c.b16 %v1129, %v1121
  %v1258 = vpack.c.b16 %v1130, %v1122
  %v1259 = vpack.c.b16 %v1131, %v1123
  %v1260 = vpack.c.b16 %v1132, %v1124
  %v1261 = vpack.c.b16 %v1133, %v1125
  %v1262 = vpack.c.b16 %v1134, %v1126
  %1391 = vmatprep.subr.bf16.mxu0 %v1136
  %1392 = vmatpush1.bf16.msra.mxu0 %v1135
  %1393 = vmatprep.subr.bf16.mxu0 %v1144
  %1394 = vmatpush1.bf16.msra.mxu0 %v1143
  %1395 = vmatprep.subr.bf16.mxu0 %v1152
  %1396 = vmatpush1.bf16.msra.mxu0 %v1151
  %1397 = vmatprep.subr.bf16.mxu0 %v1160
  %1398 = vmatpush1.bf16.msra.mxu0 %v1159
  %1399 = vmatprep.subr.bf16.mxu0 %v1168
  %1400 = vmatpush1.bf16.msra.mxu0 %v1167
  %1401 = vmatprep.subr.bf16.mxu0 %v1176
  %1402 = vmatpush1.bf16.msra.mxu0 %v1175
  %1403 = vmatprep.subr.bf16.mxu0 %v1184
  %1404 = vmatpush1.bf16.msra.mxu0 %v1183
  %1405 = vmatprep.subr.bf16.mxu0 %v1192
  %1406 = vmatpush1.bf16.msra.mxu0 %v1191
  %1407 = vmatprep.subr.bf16.mxu0 %v1200
  %1408 = vmatpush1.bf16.msra.mxu0 %v1199
  %1409 = vmatprep.subr.bf16.mxu0 %v1208
  %1410 = vmatpush1.bf16.msra.mxu0 %v1207
  %1411 = vmatprep.subr.bf16.mxu0 %v1216
  %1412 = vmatpush1.bf16.msra.mxu0 %v1215
  %1413 = vmatprep.subr.bf16.mxu0 %v1224
  %1414 = vmatpush1.bf16.msra.mxu0 %v1223
  %1415 = vmatprep.subr.bf16.mxu0 %v1232
  %1416 = vmatpush1.bf16.msra.mxu0 %v1231
  %1417 = vmatprep.subr.bf16.mxu0 %v1240
  %1418 = vmatpush1.bf16.msra.mxu0 %v1239
  %1419 = vmatprep.subr.bf16.mxu0 %v1248
  %1420 = vmatpush1.bf16.msra.mxu0 %v1247
  %1421 = vmatprep.subr.bf16.mxu0 %v1256
  %1422 = vmatpush1.bf16.msra.mxu0 %v1255
  %1423 = vmatprep.mubr.bf16.mxu0 %v622
  %1424 = vmatmul.mubr.bf16.gmra.mrb[0].mxu0 %v621
  %v1425 = vpop.f32.mrb[0].mxu0
  %v1426 = vadd.f32 0.0, %v1425
  %v1427 = vpop.f32.mrb[0].mxu0
  %v1428 = vadd.f32 0.0, %v1427
  %v1429 = vpop.f32.mrb[0].mxu0
  %v1430 = vpop.f32.mrb[0].mxu0
  %1431 = vdwg.mxu0
  %1432 = vmatprep.subr.bf16.mxu0 %v1138
  %1433 = vmatpush1.bf16.msra.mxu0 %v1137
  %1434 = vmatprep.subr.bf16.mxu0 %v1146
  %1435 = vmatpush1.bf16.msra.mxu0 %v1145
  %1436 = vmatprep.subr.bf16.mxu0 %v1154
  %1437 = vmatpush1.bf16.msra.mxu0 %v1153
  %1438 = vmatprep.subr.bf16.mxu0 %v1162
  %1439 = vmatpush1.bf16.msra.mxu0 %v1161
  %1440 = vmatprep.subr.bf16.mxu0 %v1170
  %1441 = vmatpush1.bf16.msra.mxu0 %v1169
  %1442 = vmatprep.subr.bf16.mxu0 %v1178
  %1443 = vmatpush1.bf16.msra.mxu0 %v1177
  %1444 = vmatprep.subr.bf16.mxu0 %v1186
  %1445 = vmatpush1.bf16.msra.mxu0 %v1185
  %1446 = vmatprep.subr.bf16.mxu0 %v1194
  %1447 = vmatpush1.bf16.msra.mxu0 %v1193
  %1448 = vmatprep.subr.bf16.mxu0 %v1202
  %1449 = vmatpush1.bf16.msra.mxu0 %v1201
  %1450 = vmatprep.subr.bf16.mxu0 %v1210
  %1451 = vmatpush1.bf16.msra.mxu0 %v1209
  %1452 = vmatprep.subr.bf16.mxu0 %v1218
  %1453 = vmatpush1.bf16.msra.mxu0 %v1217
  %1454 = vmatprep.subr.bf16.mxu0 %v1226
  %1455 = vmatpush1.bf16.msra.mxu0 %v1225
  %1456 = vmatprep.subr.bf16.mxu0 %v1234
  %1457 = vmatpush1.bf16.msra.mxu0 %v1233
  %1458 = vmatprep.subr.bf16.mxu0 %v1242
  %1459 = vmatpush1.bf16.msra.mxu0 %v1241
  %1460 = vmatprep.subr.bf16.mxu0 %v1250
  %1461 = vmatpush1.bf16.msra.mxu0 %v1249
  %1462 = vmatprep.subr.bf16.mxu0 %v1258
  %1463 = vmatpush1.bf16.msra.mxu0 %v1257
  %1464 = vmatprep.mubr.bf16.mxu0 %v622
  %1465 = vmatmul.mubr.bf16.gmra.mrb[0].mxu0 %v621
  %v1466 = vpop.f32.mrb[0].mxu0
  %v1467 = vadd.f32 0.0, %v1466
  %v1468 = vpop.f32.mrb[0].mxu0
  %v1469 = vadd.f32 0.0, %v1468
  %v1470 = vpop.f32.mrb[0].mxu0
  %v1471 = vpop.f32.mrb[0].mxu0
  %1472 = vdwg.mxu0
  %1473 = vmatprep.subr.bf16.mxu0 %v1140
  %1474 = vmatpush1.bf16.msra.mxu0 %v1139
  %1475 = vmatprep.subr.bf16.mxu0 %v1148
  %1476 = vmatpush1.bf16.msra.mxu0 %v1147
  %1477 = vmatprep.subr.bf16.mxu0 %v1156
  %1478 = vmatpush1.bf16.msra.mxu0 %v1155
  %1479 = vmatprep.subr.bf16.mxu0 %v1164
  %1480 = vmatpush1.bf16.msra.mxu0 %v1163
  %1481 = vmatprep.subr.bf16.mxu0 %v1172
  %1482 = vmatpush1.bf16.msra.mxu0 %v1171
  %1483 = vmatprep.subr.bf16.mxu0 %v1180
  %1484 = vmatpush1.bf16.msra.mxu0 %v1179
  %1485 = vmatprep.subr.bf16.mxu0 %v1188
  %1486 = vmatpush1.bf16.msra.mxu0 %v1187
  %1487 = vmatprep.subr.bf16.mxu0 %v1196
  %1488 = vmatpush1.bf16.msra.mxu0 %v1195
  %1489 = vmatprep.subr.bf16.mxu0 %v1204
  %1490 = vmatpush1.bf16.msra.mxu0 %v1203
  %1491 = vmatprep.subr.bf16.mxu0 %v1212
  %1492 = vmatpush1.bf16.msra.mxu0 %v1211
  %1493 = vmatprep.subr.bf16.mxu0 %v1220
  %1494 = vmatpush1.bf16.msra.mxu0 %v1219
  %1495 = vmatprep.subr.bf16.mxu0 %v1228
  %1496 = vmatpush1.bf16.msra.mxu0 %v1227
  %1497 = vmatprep.subr.bf16.mxu0 %v1236
  %1498 = vmatpush1.bf16.msra.mxu0 %v1235
  %1499 = vmatprep.subr.bf16.mxu0 %v1244
  %1500 = vmatpush1.bf16.msra.mxu0 %v1243
  %1501 = vmatprep.subr.bf16.mxu0 %v1252
  %1502 = vmatpush1.bf16.msra.mxu0 %v1251
  %1503 = vmatprep.subr.bf16.mxu0 %v1260
  %1504 = vmatpush1.bf16.msra.mxu0 %v1259
  %1505 = vmatprep.mubr.bf16.mxu0 %v622
  %1506 = vmatmul.mubr.bf16.gmra.mrb[0].mxu0 %v621
  %v1507 = vpop.f32.mrb[0].mxu0
  %v1508 = vadd.f32 0.0, %v1507
  %v1509 = vpop.f32.mrb[0].mxu0
  %v1510 = vadd.f32 0.0, %v1509
  %v1511 = vpop.f32.mrb[0].mxu0
  %v1512 = vpop.f32.mrb[0].mxu0
  %1513 = vdwg.mxu0
  %1514 = vmatprep.subr.bf16.mxu0 %v1142
  %1515 = vmatpush1.bf16.msra.mxu0 %v1141
  %1516 = vmatprep.subr.bf16.mxu0 %v1150
  %1517 = vmatpush1.bf16.msra.mxu0 %v1149
  %1518 = vmatprep.subr.bf16.mxu0 %v1158
  %1519 = vmatpush1.bf16.msra.mxu0 %v1157
  %1520 = vmatprep.subr.bf16.mxu0 %v1166
  %1521 = vmatpush1.bf16.msra.mxu0 %v1165
  %1522 = vmatprep.subr.bf16.mxu0 %v1174
  %1523 = vmatpush1.bf16.msra.mxu0 %v1173
  %1524 = vmatprep.subr.bf16.mxu0 %v1182
  %1525 = vmatpush1.bf16.msra.mxu0 %v1181
  %1526 = vmatprep.subr.bf16.mxu0 %v1190
  %1527 = vmatpush1.bf16.msra.mxu0 %v1189
  %1528 = vmatprep.subr.bf16.mxu0 %v1198
  %1529 = vmatpush1.bf16.msra.mxu0 %v1197
  %1530 = vmatprep.subr.bf16.mxu0 %v1206
  %1531 = vmatpush1.bf16.msra.mxu0 %v1205
  %1532 = vmatprep.subr.bf16.mxu0 %v1214
  %1533 = vmatpush1.bf16.msra.mxu0 %v1213
  %1534 = vmatprep.subr.bf16.mxu0 %v1222
  %1535 = vmatpush1.bf16.msra.mxu0 %v1221
  %1536 = vmatprep.subr.bf16.mxu0 %v1230
  %1537 = vmatpush1.bf16.msra.mxu0 %v1229
  %1538 = vmatprep.subr.bf16.mxu0 %v1238
  %1539 = vmatpush1.bf16.msra.mxu0 %v1237
  %1540 = vmatprep.subr.bf16.mxu0 %v1246
  %1541 = vmatpush1.bf16.msra.mxu0 %v1245
  %1542 = vmatprep.subr.bf16.mxu0 %v1254
  %1543 = vmatpush1.bf16.msra.mxu0 %v1253
  %1544 = vmatprep.subr.bf16.mxu0 %v1262
  %1545 = vmatpush1.bf16.msra.mxu0 %v1261
  %1546 = vmatprep.mubr.bf16.mxu0 %v622
  %1547 = vmatmul.mubr.bf16.gmra.mrb[0].mxu0 %v621
  %v1548 = vpop.f32.mrb[0].mxu0
  %v1549 = vadd.f32 0.0, %v1548
  %v1550 = vpop.f32.mrb[0].mxu0
  %v1551 = vadd.f32 0.0, %v1550
  %v1552 = vpop.f32.mrb[0].mxu0
  %v1553 = vpop.f32.mrb[0].mxu0
  %1554 = vdwg.mxu0
  %v1683 = vunpack.c.l.b16 %v491
  %v1684 = vunpack.c.h.b16 %v491
  %v1685 = vunpack.c.l.b16 %v492
  %v1686 = vunpack.c.h.b16 %v492
  %v1687 = vunpack.c.l.b16 %v493
  %v1688 = vunpack.c.h.b16 %v493
  %v1689 = vunpack.c.l.b16 %v494
  %v1690 = vunpack.c.h.b16 %v494
  %v1691 = vunpack.c.l.b16 %v495
  %v1692 = vunpack.c.h.b16 %v495
  %v1693 = vunpack.c.l.b16 %v496
  %v1694 = vunpack.c.h.b16 %v496
  %v1695 = vunpack.c.l.b16 %v497
  %v1696 = vunpack.c.h.b16 %v497
  %v1697 = vunpack.c.l.b16 %v498
  %v1698 = vunpack.c.h.b16 %v498
  %v1699 = vunpack.c.l.b16 %v499
  %v1700 = vunpack.c.h.b16 %v499
  %v1701 = vunpack.c.l.b16 %v500
  %v1702 = vunpack.c.h.b16 %v500
  %v1703 = vunpack.c.l.b16 %v501
  %v1704 = vunpack.c.h.b16 %v501
  %v1705 = vunpack.c.l.b16 %v502
  %v1706 = vunpack.c.h.b16 %v502
  %v1707 = vunpack.c.l.b16 %v503
  %v1708 = vunpack.c.h.b16 %v503
  %v1709 = vunpack.c.l.b16 %v504
  %v1710 = vunpack.c.h.b16 %v504
  %v1711 = vunpack.c.l.b16 %v505
  %v1712 = vunpack.c.h.b16 %v505
  %v1713 = vunpack.c.l.b16 %v506
  %v1714 = vunpack.c.h.b16 %v506
  %v1715 = vunpack.c.l.b16 %v507
  %v1716 = vunpack.c.h.b16 %v507
  %v1717 = vunpack.c.l.b16 %v508
  %v1718 = vunpack.c.h.b16 %v508
  %v1719 = vunpack.c.l.b16 %v509
  %v1720 = vunpack.c.h.b16 %v509
  %v1721 = vunpack.c.l.b16 %v510
  %v1722 = vunpack.c.h.b16 %v510
  %v1723 = vunpack.c.l.b16 %v511
  %v1724 = vunpack.c.h.b16 %v511
  %v1725 = vunpack.c.l.b16 %v512
  %v1726 = vunpack.c.h.b16 %v512
  %v1727 = vunpack.c.l.b16 %v513
  %v1728 = vunpack.c.h.b16 %v513
  %v1729 = vunpack.c.l.b16 %v514
  %v1730 = vunpack.c.h.b16 %v514
  %v1731 = vunpack.c.l.b16 %v515
  %v1732 = vunpack.c.h.b16 %v515
  %v1733 = vunpack.c.l.b16 %v516
  %v1734 = vunpack.c.h.b16 %v516
  %v1735 = vunpack.c.l.b16 %v517
  %v1736 = vunpack.c.h.b16 %v517
  %v1737 = vunpack.c.l.b16 %v518
  %v1738 = vunpack.c.h.b16 %v518
  %v1739 = vunpack.c.l.b16 %v519
  %v1740 = vunpack.c.h.b16 %v519
  %v1741 = vunpack.c.l.b16 %v520
  %v1742 = vunpack.c.h.b16 %v520
  %v1743 = vunpack.c.l.b16 %v521
  %v1744 = vunpack.c.h.b16 %v521
  %v1745 = vunpack.c.l.b16 %v522
  %v1746 = vunpack.c.h.b16 %v522
  %v1747 = vunpack.c.l.b16 %v523
  %v1748 = vunpack.c.h.b16 %v523
  %v1749 = vunpack.c.l.b16 %v524
  %v1750 = vunpack.c.h.b16 %v524
  %v1751 = vunpack.c.l.b16 %v525
  %v1752 = vunpack.c.h.b16 %v525
  %v1753 = vunpack.c.l.b16 %v526
  %v1754 = vunpack.c.h.b16 %v526
  %v1755 = vunpack.c.l.b16 %v527
  %v1756 = vunpack.c.h.b16 %v527
  %v1757 = vunpack.c.l.b16 %v528
  %v1758 = vunpack.c.h.b16 %v528
  %v1759 = vunpack.c.l.b16 %v529
  %v1760 = vunpack.c.h.b16 %v529
  %v1761 = vunpack.c.l.b16 %v530
  %v1762 = vunpack.c.h.b16 %v530
  %v1763 = vunpack.c.l.b16 %v531
  %v1764 = vunpack.c.h.b16 %v531
  %v1765 = vunpack.c.l.b16 %v532
  %v1766 = vunpack.c.h.b16 %v532
  %v1767 = vunpack.c.l.b16 %v533
  %v1768 = vunpack.c.h.b16 %v533
  %v1769 = vunpack.c.l.b16 %v534
  %v1770 = vunpack.c.h.b16 %v534
  %v1771 = vunpack.c.l.b16 %v535
  %v1772 = vunpack.c.h.b16 %v535
  %v1773 = vunpack.c.l.b16 %v536
  %v1774 = vunpack.c.h.b16 %v536
  %v1775 = vunpack.c.l.b16 %v537
  %v1776 = vunpack.c.h.b16 %v537
  %v1777 = vunpack.c.l.b16 %v538
  %v1778 = vunpack.c.h.b16 %v538
  %v1779 = vunpack.c.l.b16 %v539
  %v1780 = vunpack.c.h.b16 %v539
  %v1781 = vunpack.c.l.b16 %v540
  %v1782 = vunpack.c.h.b16 %v540
  %v1783 = vunpack.c.l.b16 %v541
  %v1784 = vunpack.c.h.b16 %v541
  %v1785 = vunpack.c.l.b16 %v542
  %v1786 = vunpack.c.h.b16 %v542
  %v1787 = vunpack.c.l.b16 %v543
  %v1788 = vunpack.c.h.b16 %v543
  %v1789 = vunpack.c.l.b16 %v544
  %v1790 = vunpack.c.h.b16 %v544
  %v1791 = vunpack.c.l.b16 %v545
  %v1792 = vunpack.c.h.b16 %v545
  %v1793 = vunpack.c.l.b16 %v546
  %v1794 = vunpack.c.h.b16 %v546
  %v1795 = vunpack.c.l.b16 %v547
  %v1796 = vunpack.c.h.b16 %v547
  %v1797 = vunpack.c.l.b16 %v548
  %v1798 = vunpack.c.h.b16 %v548
  %v1799 = vunpack.c.l.b16 %v549
  %v1800 = vunpack.c.h.b16 %v549
  %v1801 = vunpack.c.l.b16 %v550
  %v1802 = vunpack.c.h.b16 %v550
  %v1803 = vunpack.c.l.b16 %v551
  %v1804 = vunpack.c.h.b16 %v551
  %v1805 = vunpack.c.l.b16 %v552
  %v1806 = vunpack.c.h.b16 %v552
  %v1807 = vunpack.c.l.b16 %v553
  %v1808 = vunpack.c.h.b16 %v553
  %v1809 = vunpack.c.l.b16 %v554
  %v1810 = vunpack.c.h.b16 %v554
  %v1811 = vunpack.c.l.b16 %v555
  %v1812 = vunpack.c.h.b16 %v555
  %v1813 = vunpack.c.l.b16 %v556
  %v1814 = vunpack.c.h.b16 %v556
  %v1815 = vunpack.c.l.b16 %v557
  %v1816 = vunpack.c.h.b16 %v557
  %v1817 = vunpack.c.l.b16 %v558
  %v1818 = vunpack.c.h.b16 %v558
  %v1819 = vunpack.c.l.b16 %v559
  %v1820 = vunpack.c.h.b16 %v559
  %v1821 = vunpack.c.l.b16 %v560
  %v1822 = vunpack.c.h.b16 %v560
  %v1823 = vunpack.c.l.b16 %v561
  %v1824 = vunpack.c.h.b16 %v561
  %v1825 = vunpack.c.l.b16 %v562
  %v1826 = vunpack.c.h.b16 %v562
  %v1827 = vunpack.c.l.b16 %v563
  %v1828 = vunpack.c.h.b16 %v563
  %v1829 = vunpack.c.l.b16 %v564
  %v1830 = vunpack.c.h.b16 %v564
  %v1831 = vunpack.c.l.b16 %v565
  %v1832 = vunpack.c.h.b16 %v565
  %v1833 = vunpack.c.l.b16 %v566
  %v1834 = vunpack.c.h.b16 %v566
  %v1835 = vunpack.c.l.b16 %v567
  %v1836 = vunpack.c.h.b16 %v567
  %v1837 = vunpack.c.l.b16 %v568
  %v1838 = vunpack.c.h.b16 %v568
  %v1839 = vunpack.c.l.b16 %v569
  %v1840 = vunpack.c.h.b16 %v569
  %v1841 = vunpack.c.l.b16 %v570
  %v1842 = vunpack.c.h.b16 %v570
  %v1843 = vunpack.c.l.b16 %v571
  %v1844 = vunpack.c.h.b16 %v571
  %v1845 = vunpack.c.l.b16 %v572
  %v1846 = vunpack.c.h.b16 %v572
  %v1847 = vunpack.c.l.b16 %v573
  %v1848 = vunpack.c.h.b16 %v573
  %v1849 = vunpack.c.l.b16 %v574
  %v1850 = vunpack.c.h.b16 %v574
  %v1851 = vunpack.c.l.b16 %v575
  %v1852 = vunpack.c.h.b16 %v575
  %v1853 = vunpack.c.l.b16 %v576
  %v1854 = vunpack.c.h.b16 %v576
  %v1855 = vunpack.c.l.b16 %v577
  %v1856 = vunpack.c.h.b16 %v577
  %v1857 = vunpack.c.l.b16 %v578
  %v1858 = vunpack.c.h.b16 %v578
  %v1859 = vunpack.c.l.b16 %v579
  %v1860 = vunpack.c.h.b16 %v579
  %v1861 = vunpack.c.l.b16 %v580
  %v1862 = vunpack.c.h.b16 %v580
  %v1863 = vunpack.c.l.b16 %v581
  %v1864 = vunpack.c.h.b16 %v581
  %v1865 = vunpack.c.l.b16 %v582
  %v1866 = vunpack.c.h.b16 %v582
  %v1867 = vunpack.c.l.b16 %v583
  %v1868 = vunpack.c.h.b16 %v583
  %v1869 = vunpack.c.l.b16 %v584
  %v1870 = vunpack.c.h.b16 %v584
  %v1871 = vunpack.c.l.b16 %v585
  %v1872 = vunpack.c.h.b16 %v585
  %v1873 = vunpack.c.l.b16 %v586
  %v1874 = vunpack.c.h.b16 %v586
  %v1875 = vunpack.c.l.b16 %v587
  %v1876 = vunpack.c.h.b16 %v587
  %v1877 = vunpack.c.l.b16 %v588
  %v1878 = vunpack.c.h.b16 %v588
  %v1879 = vunpack.c.l.b16 %v589
  %v1880 = vunpack.c.h.b16 %v589
  %v1881 = vunpack.c.l.b16 %v590
  %v1882 = vunpack.c.h.b16 %v590
  %v1883 = vunpack.c.l.b16 %v591
  %v1884 = vunpack.c.h.b16 %v591
  %v1885 = vunpack.c.l.b16 %v592
  %v1886 = vunpack.c.h.b16 %v592
  %v1887 = vunpack.c.l.b16 %v593
  %v1888 = vunpack.c.h.b16 %v593
  %v1889 = vunpack.c.l.b16 %v594
  %v1890 = vunpack.c.h.b16 %v594
  %v1891 = vunpack.c.l.b16 %v595
  %v1892 = vunpack.c.h.b16 %v595
  %v1893 = vunpack.c.l.b16 %v596
  %v1894 = vunpack.c.h.b16 %v596
  %v1895 = vunpack.c.l.b16 %v597
  %v1896 = vunpack.c.h.b16 %v597
  %v1897 = vunpack.c.l.b16 %v598
  %v1898 = vunpack.c.h.b16 %v598
  %v1899 = vunpack.c.l.b16 %v599
  %v1900 = vunpack.c.h.b16 %v599
  %v1901 = vunpack.c.l.b16 %v600
  %v1902 = vunpack.c.h.b16 %v600
  %v1903 = vunpack.c.l.b16 %v601
  %v1904 = vunpack.c.h.b16 %v601
  %v1905 = vunpack.c.l.b16 %v602
  %v1906 = vunpack.c.h.b16 %v602
  %v1907 = vunpack.c.l.b16 %v603
  %v1908 = vunpack.c.h.b16 %v603
  %v1909 = vunpack.c.l.b16 %v604
  %v1910 = vunpack.c.h.b16 %v604
  %v1911 = vunpack.c.l.b16 %v605
  %v1912 = vunpack.c.h.b16 %v605
  %v1913 = vunpack.c.l.b16 %v606
  %v1914 = vunpack.c.h.b16 %v606
  %v1915 = vunpack.c.l.b16 %v607
  %v1916 = vunpack.c.h.b16 %v607
  %v1917 = vunpack.c.l.b16 %v608
  %v1918 = vunpack.c.h.b16 %v608
  %v1919 = vunpack.c.l.b16 %v609
  %v1920 = vunpack.c.h.b16 %v609
  %v1921 = vunpack.c.l.b16 %v610
  %v1922 = vunpack.c.h.b16 %v610
  %v1923 = vunpack.c.l.b16 %v611
  %v1924 = vunpack.c.h.b16 %v611
  %v1925 = vunpack.c.l.b16 %v612
  %v1926 = vunpack.c.h.b16 %v612
  %v1927 = vunpack.c.l.b16 %v613
  %v1928 = vunpack.c.h.b16 %v613
  %v1929 = vunpack.c.l.b16 %v614
  %v1930 = vunpack.c.h.b16 %v614
  %v1931 = vunpack.c.l.b16 %v615
  %v1932 = vunpack.c.h.b16 %v615
  %v1933 = vunpack.c.l.b16 %v616
  %v1934 = vunpack.c.h.b16 %v616
  %v1935 = vunpack.c.l.b16 %v617
  %v1936 = vunpack.c.h.b16 %v617
  %v1937 = vunpack.c.l.b16 %v618
  %v1938 = vunpack.c.h.b16 %v618
  %v1939 = vpack.c.b16 %v1691, %v1683
  %v1940 = vpack.c.b16 %v1692, %v1684
  %v1941 = vpack.c.b16 %v1693, %v1685
  %v1942 = vpack.c.b16 %v1694, %v1686
  %v1943 = vpack.c.b16 %v1695, %v1687
  %v1944 = vpack.c.b16 %v1696, %v1688
  %v1945 = vpack.c.b16 %v1697, %v1689
  %v1946 = vpack.c.b16 %v1698, %v1690
  %v1947 = vpack.c.b16 %v1707, %v1699
  %v1948 = vpack.c.b16 %v1708, %v1700
  %v1949 = vpack.c.b16 %v1709, %v1701
  %v1950 = vpack.c.b16 %v1710, %v1702
  %v1951 = vpack.c.b16 %v1711, %v1703
  %v1952 = vpack.c.b16 %v1712, %v1704
  %v1953 = vpack.c.b16 %v1713, %v1705
  %v1954 = vpack.c.b16 %v1714, %v1706
  %v1955 = vpack.c.b16 %v1723, %v1715
  %v1956 = vpack.c.b16 %v1724, %v1716
  %v1957 = vpack.c.b16 %v1725, %v1717
  %v1958 = vpack.c.b16 %v1726, %v1718
  %v1959 = vpack.c.b16 %v1727, %v1719
  %v1960 = vpack.c.b16 %v1728, %v1720
  %v1961 = vpack.c.b16 %v1729, %v1721
  %v1962 = vpack.c.b16 %v1730, %v1722
  %v1963 = vpack.c.b16 %v1739, %v1731
  %v1964 = vpack.c.b16 %v1740, %v1732
  %v1965 = vpack.c.b16 %v1741, %v1733
  %v1966 = vpack.c.b16 %v1742, %v1734
  %v1967 = vpack.c.b16 %v1743, %v1735
  %v1968 = vpack.c.b16 %v1744, %v1736
  %v1969 = vpack.c.b16 %v1745, %v1737
  %v1970 = vpack.c.b16 %v1746, %v1738
  %v1971 = vpack.c.b16 %v1755, %v1747
  %v1972 = vpack.c.b16 %v1756, %v1748
  %v1973 = vpack.c.b16 %v1757, %v1749
  %v1974 = vpack.c.b16 %v1758, %v1750
  %v1975 = vpack.c.b16 %v1759, %v1751
  %v1976 = vpack.c.b16 %v1760, %v1752
  %v1977 = vpack.c.b16 %v1761, %v1753
  %v1978 = vpack.c.b16 %v1762, %v1754
  %v1979 = vpack.c.b16 %v1771, %v1763
  %v1980 = vpack.c.b16 %v1772, %v1764
  %v1981 = vpack.c.b16 %v1773, %v1765
  %v1982 = vpack.c.b16 %v1774, %v1766
  %v1983 = vpack.c.b16 %v1775, %v1767
  %v1984 = vpack.c.b16 %v1776, %v1768
  %v1985 = vpack.c.b16 %v1777, %v1769
  %v1986 = vpack.c.b16 %v1778, %v1770
  %v1987 = vpack.c.b16 %v1787, %v1779
  %v1988 = vpack.c.b16 %v1788, %v1780
  %v1989 = vpack.c.b16 %v1789, %v1781
  %v1990 = vpack.c.b16 %v1790, %v1782
  %v1991 = vpack.c.b16 %v1791, %v1783
  %v1992 = vpack.c.b16 %v1792, %v1784
  %v1993 = vpack.c.b16 %v1793, %v1785
  %v1994 = vpack.c.b16 %v1794, %v1786
  %v1995 = vpack.c.b16 %v1803, %v1795
  %v1996 = vpack.c.b16 %v1804, %v1796
  %v1997 = vpack.c.b16 %v1805, %v1797
  %v1998 = vpack.c.b16 %v1806, %v1798
  %v1999 = vpack.c.b16 %v1807, %v1799
  %v2000 = vpack.c.b16 %v1808, %v1800
  %v2001 = vpack.c.b16 %v1809, %v1801
  %v2002 = vpack.c.b16 %v1810, %v1802
  %v2003 = vpack.c.b16 %v1819, %v1811
  %v2004 = vpack.c.b16 %v1820, %v1812
  %v2005 = vpack.c.b16 %v1821, %v1813
  %v2006 = vpack.c.b16 %v1822, %v1814
  %v2007 = vpack.c.b16 %v1823, %v1815
  %v2008 = vpack.c.b16 %v1824, %v1816
  %v2009 = vpack.c.b16 %v1825, %v1817
  %v2010 = vpack.c.b16 %v1826, %v1818
  %v2011 = vpack.c.b16 %v1835, %v1827
  %v2012 = vpack.c.b16 %v1836, %v1828
  %v2013 = vpack.c.b16 %v1837, %v1829
  %v2014 = vpack.c.b16 %v1838, %v1830
  %v2015 = vpack.c.b16 %v1839, %v1831
  %v2016 = vpack.c.b16 %v1840, %v1832
  %v2017 = vpack.c.b16 %v1841, %v1833
  %v2018 = vpack.c.b16 %v1842, %v1834
  %v2019 = vpack.c.b16 %v1851, %v1843
  %v2020 = vpack.c.b16 %v1852, %v1844
  %v2021 = vpack.c.b16 %v1853, %v1845
  %v2022 = vpack.c.b16 %v1854, %v1846
  %v2023 = vpack.c.b16 %v1855, %v1847
  %v2024 = vpack.c.b16 %v1856, %v1848
  %v2025 = vpack.c.b16 %v1857, %v1849
  %v2026 = vpack.c.b16 %v1858, %v1850
  %v2027 = vpack.c.b16 %v1867, %v1859
  %v2028 = vpack.c.b16 %v1868, %v1860
  %v2029 = vpack.c.b16 %v1869, %v1861
  %v2030 = vpack.c.b16 %v1870, %v1862
  %v2031 = vpack.c.b16 %v1871, %v1863
  %v2032 = vpack.c.b16 %v1872, %v1864
  %v2033 = vpack.c.b16 %v1873, %v1865
  %v2034 = vpack.c.b16 %v1874, %v1866
  %v2035 = vpack.c.b16 %v1883, %v1875
  %v2036 = vpack.c.b16 %v1884, %v1876
  %v2037 = vpack.c.b16 %v1885, %v1877
  %v2038 = vpack.c.b16 %v1886, %v1878
  %v2039 = vpack.c.b16 %v1887, %v1879
  %v2040 = vpack.c.b16 %v1888, %v1880
  %v2041 = vpack.c.b16 %v1889, %v1881
  %v2042 = vpack.c.b16 %v1890, %v1882
  %v2043 = vpack.c.b16 %v1899, %v1891
  %v2044 = vpack.c.b16 %v1900, %v1892
  %v2045 = vpack.c.b16 %v1901, %v1893
  %v2046 = vpack.c.b16 %v1902, %v1894
  %v2047 = vpack.c.b16 %v1903, %v1895
  %v2048 = vpack.c.b16 %v1904, %v1896
  %v2049 = vpack.c.b16 %v1905, %v1897
  %v2050 = vpack.c.b16 %v1906, %v1898
  %v2051 = vpack.c.b16 %v1915, %v1907
  %v2052 = vpack.c.b16 %v1916, %v1908
  %v2053 = vpack.c.b16 %v1917, %v1909
  %v2054 = vpack.c.b16 %v1918, %v1910
  %v2055 = vpack.c.b16 %v1919, %v1911
  %v2056 = vpack.c.b16 %v1920, %v1912
  %v2057 = vpack.c.b16 %v1921, %v1913
  %v2058 = vpack.c.b16 %v1922, %v1914
  %v2059 = vpack.c.b16 %v1931, %v1923
  %v2060 = vpack.c.b16 %v1932, %v1924
  %v2061 = vpack.c.b16 %v1933, %v1925
  %v2062 = vpack.c.b16 %v1934, %v1926
  %v2063 = vpack.c.b16 %v1935, %v1927
  %v2064 = vpack.c.b16 %v1936, %v1928
  %v2065 = vpack.c.b16 %v1937, %v1929
  %v2066 = vpack.c.b16 %v1938, %v1930
  %2195 = vmatprep.subr.bf16.mxu0 %v1940
  %2196 = vmatpush1.bf16.msra.mxu0 %v1939
  %2197 = vmatprep.subr.bf16.mxu0 %v1948
  %2198 = vmatpush1.bf16.msra.mxu0 %v1947
  %2199 = vmatprep.subr.bf16.mxu0 %v1956
  %2200 = vmatpush1.bf16.msra.mxu0 %v1955
  %2201 = vmatprep.subr.bf16.mxu0 %v1964
  %2202 = vmatpush1.bf16.msra.mxu0 %v1963
  %2203 = vmatprep.subr.bf16.mxu0 %v1972
  %2204 = vmatpush1.bf16.msra.mxu0 %v1971
  %2205 = vmatprep.subr.bf16.mxu0 %v1980
  %2206 = vmatpush1.bf16.msra.mxu0 %v1979
  %2207 = vmatprep.subr.bf16.mxu0 %v1988
  %2208 = vmatpush1.bf16.msra.mxu0 %v1987
  %2209 = vmatprep.subr.bf16.mxu0 %v1996
  %2210 = vmatpush1.bf16.msra.mxu0 %v1995
  %2211 = vmatprep.subr.bf16.mxu0 %v2004
  %2212 = vmatpush1.bf16.msra.mxu0 %v2003
  %2213 = vmatprep.subr.bf16.mxu0 %v2012
  %2214 = vmatpush1.bf16.msra.mxu0 %v2011
  %2215 = vmatprep.subr.bf16.mxu0 %v2020
  %2216 = vmatpush1.bf16.msra.mxu0 %v2019
  %2217 = vmatprep.subr.bf16.mxu0 %v2028
  %2218 = vmatpush1.bf16.msra.mxu0 %v2027
  %2219 = vmatprep.subr.bf16.mxu0 %v2036
  %2220 = vmatpush1.bf16.msra.mxu0 %v2035
  %2221 = vmatprep.subr.bf16.mxu0 %v2044
  %2222 = vmatpush1.bf16.msra.mxu0 %v2043
  %2223 = vmatprep.subr.bf16.mxu0 %v2052
  %2224 = vmatpush1.bf16.msra.mxu0 %v2051
  %2225 = vmatprep.subr.bf16.mxu0 %v2060
  %2226 = vmatpush1.bf16.msra.mxu0 %v2059
  %2227 = vmatprep.mubr.bf16.mxu0 %v490
  %2228 = vmatmul.mubr.bf16.gmra.mrb[0].mxu0 %v489
  %v2229 = vpop.f32.mrb[0].mxu0
  %v2230 = vadd.f32 %v1426, %v2229
  %v2231 = vpop.f32.mrb[0].mxu0
  %v2232 = vadd.f32 %v1428, %v2231
  %v2233 = vpop.f32.mrb[0].mxu0
  %v2234 = vpop.f32.mrb[0].mxu0
  %2235 = vdwg.mxu0
  %2236 = vmatprep.subr.bf16.mxu0 %v1942
  %2237 = vmatpush1.bf16.msra.mxu0 %v1941
  %2238 = vmatprep.subr.bf16.mxu0 %v1950
  %2239 = vmatpush1.bf16.msra.mxu0 %v1949
  %2240 = vmatprep.subr.bf16.mxu0 %v1958
  %2241 = vmatpush1.bf16.msra.mxu0 %v1957
  %2242 = vmatprep.subr.bf16.mxu0 %v1966
  %2243 = vmatpush1.bf16.msra.mxu0 %v1965
  %2244 = vmatprep.subr.bf16.mxu0 %v1974
  %2245 = vmatpush1.bf16.msra.mxu0 %v1973
  %2246 = vmatprep.subr.bf16.mxu0 %v1982
  %2247 = vmatpush1.bf16.msra.mxu0 %v1981
  %2248 = vmatprep.subr.bf16.mxu0 %v1990
  %2249 = vmatpush1.bf16.msra.mxu0 %v1989
  %2250 = vmatprep.subr.bf16.mxu0 %v1998
  %2251 = vmatpush1.bf16.msra.mxu0 %v1997
  %2252 = vmatprep.subr.bf16.mxu0 %v2006
  %2253 = vmatpush1.bf16.msra.mxu0 %v2005
  %2254 = vmatprep.subr.bf16.mxu0 %v2014
  %2255 = vmatpush1.bf16.msra.mxu0 %v2013
  %2256 = vmatprep.subr.bf16.mxu0 %v2022
  %2257 = vmatpush1.bf16.msra.mxu0 %v2021
  %2258 = vmatprep.subr.bf16.mxu0 %v2030
  %2259 = vmatpush1.bf16.msra.mxu0 %v2029
  %2260 = vmatprep.subr.bf16.mxu0 %v2038
  %2261 = vmatpush1.bf16.msra.mxu0 %v2037
  %2262 = vmatprep.subr.bf16.mxu0 %v2046
  %2263 = vmatpush1.bf16.msra.mxu0 %v2045
  %2264 = vmatprep.subr.bf16.mxu0 %v2054
  %2265 = vmatpush1.bf16.msra.mxu0 %v2053
  %2266 = vmatprep.subr.bf16.mxu0 %v2062
  %2267 = vmatpush1.bf16.msra.mxu0 %v2061
  %2268 = vmatprep.mubr.bf16.mxu0 %v490
  %2269 = vmatmul.mubr.bf16.gmra.mrb[0].mxu0 %v489
  %v2270 = vpop.f32.mrb[0].mxu0
  %v2271 = vadd.f32 %v1467, %v2270
  %v2272 = vpop.f32.mrb[0].mxu0
  %v2273 = vadd.f32 %v1469, %v2272
  %v2274 = vpop.f32.mrb[0].mxu0
  %v2275 = vpop.f32.mrb[0].mxu0
  %2276 = vdwg.mxu0
  %2277 = vmatprep.subr.bf16.mxu0 %v1944
  %2278 = vmatpush1.bf16.msra.mxu0 %v1943
  %2279 = vmatprep.subr.bf16.mxu0 %v1952
  %2280 = vmatpush1.bf16.msra.mxu0 %v1951
  %2281 = vmatprep.subr.bf16.mxu0 %v1960
  %2282 = vmatpush1.bf16.msra.mxu0 %v1959
  %2283 = vmatprep.subr.bf16.mxu0 %v1968
  %2284 = vmatpush1.bf16.msra.mxu0 %v1967
  %2285 = vmatprep.subr.bf16.mxu0 %v1976
  %2286 = vmatpush1.bf16.msra.mxu0 %v1975
  %2287 = vmatprep.subr.bf16.mxu0 %v1984
  %2288 = vmatpush1.bf16.msra.mxu0 %v1983
  %2289 = vmatprep.subr.bf16.mxu0 %v1992
  %2290 = vmatpush1.bf16.msra.mxu0 %v1991
  %2291 = vmatprep.subr.bf16.mxu0 %v2000
  %2292 = vmatpush1.bf16.msra.mxu0 %v1999
  %2293 = vmatprep.subr.bf16.mxu0 %v2008
  %2294 = vmatpush1.bf16.msra.mxu0 %v2007
  %2295 = vmatprep.subr.bf16.mxu0 %v2016
  %2296 = vmatpush1.bf16.msra.mxu0 %v2015
  %2297 = vmatprep.subr.bf16.mxu0 %v2024
  %2298 = vmatpush1.bf16.msra.mxu0 %v2023
  %2299 = vmatprep.subr.bf16.mxu0 %v2032
  %2300 = vmatpush1.bf16.msra.mxu0 %v2031
  %2301 = vmatprep.subr.bf16.mxu0 %v2040
  %2302 = vmatpush1.bf16.msra.mxu0 %v2039
  %2303 = vmatprep.subr.bf16.mxu0 %v2048
  %2304 = vmatpush1.bf16.msra.mxu0 %v2047
  %2305 = vmatprep.subr.bf16.mxu0 %v2056
  %2306 = vmatpush1.bf16.msra.mxu0 %v2055
  %2307 = vmatprep.subr.bf16.mxu0 %v2064
  %2308 = vmatpush1.bf16.msra.mxu0 %v2063
  %2309 = vmatprep.mubr.bf16.mxu0 %v490
  %2310 = vmatmul.mubr.bf16.gmra.mrb[0].mxu0 %v489
  %v2311 = vpop.f32.mrb[0].mxu0
  %v2312 = vadd.f32 %v1508, %v2311
  %v2313 = vpop.f32.mrb[0].mxu0
  %v2314 = vadd.f32 %v1510, %v2313
  %v2315 = vpop.f32.mrb[0].mxu0
  %v2316 = vpop.f32.mrb[0].mxu0
  %2317 = vdwg.mxu0
  %2318 = vmatprep.subr.bf16.mxu0 %v1946
  %2319 = vmatpush1.bf16.msra.mxu0 %v1945
  %2320 = vmatprep.subr.bf16.mxu0 %v1954
  %2321 = vmatpush1.bf16.msra.mxu0 %v1953
  %2322 = vmatprep.subr.bf16.mxu0 %v1962
  %2323 = vmatpush1.bf16.msra.mxu0 %v1961
  %2324 = vmatprep.subr.bf16.mxu0 %v1970
  %2325 = vmatpush1.bf16.msra.mxu0 %v1969
  %2326 = vmatprep.subr.bf16.mxu0 %v1978
  %2327 = vmatpush1.bf16.msra.mxu0 %v1977
  %2328 = vmatprep.subr.bf16.mxu0 %v1986
  %2329 = vmatpush1.bf16.msra.mxu0 %v1985
  %2330 = vmatprep.subr.bf16.mxu0 %v1994
  %2331 = vmatpush1.bf16.msra.mxu0 %v1993
  %2332 = vmatprep.subr.bf16.mxu0 %v2002
  %2333 = vmatpush1.bf16.msra.mxu0 %v2001
  %2334 = vmatprep.subr.bf16.mxu0 %v2010
  %2335 = vmatpush1.bf16.msra.mxu0 %v2009
  %2336 = vmatprep.subr.bf16.mxu0 %v2018
  %2337 = vmatpush1.bf16.msra.mxu0 %v2017
  %2338 = vmatprep.subr.bf16.mxu0 %v2026
  %2339 = vmatpush1.bf16.msra.mxu0 %v2025
  %2340 = vmatprep.subr.bf16.mxu0 %v2034
  %2341 = vmatpush1.bf16.msra.mxu0 %v2033
  %2342 = vmatprep.subr.bf16.mxu0 %v2042
  %2343 = vmatpush1.bf16.msra.mxu0 %v2041
  %2344 = vmatprep.subr.bf16.mxu0 %v2050
  %2345 = vmatpush1.bf16.msra.mxu0 %v2049
  %2346 = vmatprep.subr.bf16.mxu0 %v2058
  %2347 = vmatpush1.bf16.msra.mxu0 %v2057
  %2348 = vmatprep.subr.bf16.mxu0 %v2066
  %2349 = vmatpush1.bf16.msra.mxu0 %v2065
  %2350 = vmatprep.mubr.bf16.mxu0 %v490
  %2351 = vmatmul.mubr.bf16.gmra.mrb[0].mxu0 %v489
  %v2352 = vpop.f32.mrb[0].mxu0
  %v2353 = vadd.f32 %v1549, %v2352
  %v2354 = vpop.f32.mrb[0].mxu0
  %v2355 = vadd.f32 %v1551, %v2354
  %v2356 = vpop.f32.mrb[0].mxu0
  %v2357 = vpop.f32.mrb[0].mxu0
  %2358 = vdwg.mxu0
  %v2359 = vld [vmem:[%s11] sm:$0xff]
  %v2361 = vlaneseq
  %v2362 = vshrl.u32 %v2361, 7
  %v2363 = vsub.s32 0, %v2362
  %v2364 = vrot.slane %v2359, %v2363
  %v2365 = vlaneseq
  %v2366 = vshrl.u32 %v2365, 7
  %v2367 = vsub.s32 1, %v2366
  %v2368 = vrot.slane %v2359, %v2367
  %v2369 = vlaneseq
  %v2370 = vshrl.u32 %v2369, 7
  %v2371 = vsub.s32 2, %v2370
  %v2372 = vrot.slane %v2359, %v2371
  %v2373 = vlaneseq
  %v2374 = vshrl.u32 %v2373, 7
  %v2375 = vsub.s32 3, %v2374
  %v2376 = vrot.slane %v2359, %v2375
  %v2377 = vlaneseq
  %v2378 = vshrl.u32 %v2377, 7
  %v2379 = vsub.s32 4, %v2378
  %v2380 = vrot.slane %v2359, %v2379
  %v2381 = vlaneseq
  %v2382 = vshrl.u32 %v2381, 7
  %v2383 = vsub.s32 5, %v2382
  %v2384 = vrot.slane %v2359, %v2383
  %v2385 = vlaneseq
  %v2386 = vshrl.u32 %v2385, 7
  %v2387 = vsub.s32 6, %v2386
  %v2388 = vrot.slane %v2359, %v2387
  %v2389 = vlaneseq
  %v2390 = vshrl.u32 %v2389, 7
  %v2391 = vsub.s32 7, %v2390
  %v2392 = vrot.slane %v2359, %v2391
  %v2401 = vadd.f32 %v2230, %v2364
  %v2402 = vadd.f32 %v2232, %v2368
  %v2403 = vadd.f32 %v2271, %v2372
  %v2404 = vadd.f32 %v2273, %v2376
  %v2405 = vadd.f32 %v2312, %v2380
  %v2406 = vadd.f32 %v2314, %v2384
  %v2407 = vadd.f32 %v2353, %v2388
  %v2408 = vadd.f32 %v2355, %v2392
  %v2409 = vmul.f32 %v2401, 0.5
  %v2410 = vmul.f32 %v2402, 0.5
  %v2411 = vtanh.pop %v2409
  %v2412 = vtanh.pop %v2410
  %v2413 = vadd.f32 %v2411, 1.0
  %v2414 = vadd.f32 %v2412, 1.0
  %v2415 = vmul.f32 %v2413, 0.5
  %v2416 = vmul.f32 %v2414, 0.5
  %v2417 = vmul.f32 %v2403, 0.5
  %v2418 = vmul.f32 %v2404, 0.5
  %v2419 = vtanh.pop %v2417
  %v2420 = vtanh.pop %v2418
  %v2421 = vadd.f32 %v2419, 1.0
  %v2422 = vadd.f32 %v2420, 1.0
  %v2423 = vmul.f32 %v2421, 0.5
  %v2424 = vmul.f32 %v2422, 0.5
  %v2425 = vtanh.pop %v2405
  %v2426 = vtanh.pop %v2406
  %v2427 = vmul.f32 %v2407, 0.5
  %v2428 = vmul.f32 %v2408, 0.5
  %v2429 = vtanh.pop %v2427
  %v2430 = vtanh.pop %v2428
  %v2431 = vadd.f32 %v2429, 1.0
  %v2432 = vadd.f32 %v2430, 1.0
  %v2433 = vmul.f32 %v2431, 0.5
  %v2434 = vmul.f32 %v2432, 0.5
  %v2435 = vld [vmem:[%s3] sm:$0xff]
  %v2436 = vld [vmem:[%s3 + $0x8] sm:$0xff]
  %v2437 = vmul.f32 %v2423, %v2435
  %v2438 = vmul.f32 %v2424, %v2436
  %v2439 = vmul.f32 %v2415, %v2425
  %v2440 = vmul.f32 %v2416, %v2426
  %v2441 = vadd.f32 %v2437, %v2439
  %v2442 = vadd.f32 %v2438, %v2440
  %v2443 = vtanh.pop %v2441
  %v2444 = vtanh.pop %v2442
  %v2445 = vmul.f32 %v2433, %v2443
  %v2446 = vmul.f32 %v2434, %v2444
  %2447 = vst [vmem:[%s15] sm:$0xff] %v2445
  %2448 = vst [vmem:[%s15 + $0x8] sm:$0xff] %v2446
  %2449 = vst [vmem:[%s16] sm:$0xff] %v2441
  %2450 = vst [vmem:[%s16 + $0x8] sm:$0xff] %v2442
  %v2451 = vpack.c.bf16 %v2445, %v2445
  %v2452 = vpack.c.bf16 %v2446, %v2446
  %v2453 = vld [vmem:[%s12] sm:$0xf]
  %v2454 = vld [vmem:[%s12 + $0x4] sm:$0xf]
  %v2455 = vld [vmem:[%s12 + $0x8] sm:$0xf]
  %v2456 = vld [vmem:[%s12 + $0xc] sm:$0xf]
  %v2457 = vld [vmem:[%s12 + $0x10] sm:$0xf]
  %v2458 = vld [vmem:[%s12 + $0x14] sm:$0xf]
  %v2459 = vld [vmem:[%s12 + $0x18] sm:$0xf]
  %v2460 = vld [vmem:[%s12 + $0x1c] sm:$0xf]
  %v2461 = vld [vmem:[%s12 + $0x20] sm:$0xf]
  %v2462 = vld [vmem:[%s12 + $0x24] sm:$0xf]
  %v2463 = vld [vmem:[%s12 + $0x28] sm:$0xf]
  %v2464 = vld [vmem:[%s12 + $0x2c] sm:$0xf]
  %v2465 = vld [vmem:[%s12 + $0x30] sm:$0xf]
  %v2466 = vld [vmem:[%s12 + $0x34] sm:$0xf]
  %v2467 = vld [vmem:[%s12 + $0x38] sm:$0xf]
  %v2468 = vld [vmem:[%s12 + $0x3c] sm:$0xf]
  %v2469 = vld [vmem:[%s12 + $0x40] sm:$0xf]
  %v2470 = vld [vmem:[%s12 + $0x44] sm:$0xf]
  %v2471 = vld [vmem:[%s12 + $0x48] sm:$0xf]
  %v2472 = vld [vmem:[%s12 + $0x4c] sm:$0xf]
  %v2473 = vld [vmem:[%s12 + $0x50] sm:$0xf]
  %v2474 = vld [vmem:[%s12 + $0x54] sm:$0xf]
  %v2475 = vld [vmem:[%s12 + $0x58] sm:$0xf]
  %v2476 = vld [vmem:[%s12 + $0x5c] sm:$0xf]
  %v2477 = vld [vmem:[%s12 + $0x60] sm:$0xf]
  %v2478 = vld [vmem:[%s12 + $0x64] sm:$0xf]
  %v2479 = vld [vmem:[%s12 + $0x68] sm:$0xf]
  %v2480 = vld [vmem:[%s12 + $0x6c] sm:$0xf]
  %v2481 = vld [vmem:[%s12 + $0x70] sm:$0xf]
  %v2482 = vld [vmem:[%s12 + $0x74] sm:$0xf]
  %v2483 = vld [vmem:[%s12 + $0x78] sm:$0xf]
  %v2484 = vld [vmem:[%s12 + $0x7c] sm:$0xf]
  %v2485 = vld [vmem:[%s13] sm:$0x1]
  %v2487 = vlaneseq
  %v2488 = vshrl.u32 %v2487, 7
  %v2489 = vsub.s32 0, %v2488
  %v2490 = vrot.slane %v2485, %v2489
  %v2524 = vunpack.c.l.b16 %v2453
  %v2525 = vunpack.c.l.b16 %v2454
  %v2526 = vunpack.c.l.b16 %v2455
  %v2527 = vunpack.c.l.b16 %v2456
  %v2528 = vunpack.c.l.b16 %v2457
  %v2529 = vunpack.c.l.b16 %v2458
  %v2530 = vunpack.c.l.b16 %v2459
  %v2531 = vunpack.c.l.b16 %v2460
  %v2532 = vunpack.c.l.b16 %v2461
  %v2533 = vunpack.c.l.b16 %v2462
  %v2534 = vunpack.c.l.b16 %v2463
  %v2535 = vunpack.c.l.b16 %v2464
  %v2536 = vunpack.c.l.b16 %v2465
  %v2537 = vunpack.c.l.b16 %v2466
  %v2538 = vunpack.c.l.b16 %v2467
  %v2539 = vunpack.c.l.b16 %v2468
  %v2540 = vunpack.c.l.b16 %v2469
  %v2541 = vunpack.c.l.b16 %v2470
  %v2542 = vunpack.c.l.b16 %v2471
  %v2543 = vunpack.c.l.b16 %v2472
  %v2544 = vunpack.c.l.b16 %v2473
  %v2545 = vunpack.c.l.b16 %v2474
  %v2546 = vunpack.c.l.b16 %v2475
  %v2547 = vunpack.c.l.b16 %v2476
  %v2548 = vunpack.c.l.b16 %v2477
  %v2549 = vunpack.c.l.b16 %v2478
  %v2550 = vunpack.c.l.b16 %v2479
  %v2551 = vunpack.c.l.b16 %v2480
  %v2552 = vunpack.c.l.b16 %v2481
  %v2553 = vunpack.c.l.b16 %v2482
  %v2554 = vunpack.c.l.b16 %v2483
  %v2555 = vunpack.c.l.b16 %v2484
  %v2556 = vpack.c.b16 %v2525, %v2524
  %v2557 = vpack.c.b16 %v2527, %v2526
  %v2558 = vpack.c.b16 %v2529, %v2528
  %v2559 = vpack.c.b16 %v2531, %v2530
  %v2560 = vpack.c.b16 %v2533, %v2532
  %v2561 = vpack.c.b16 %v2535, %v2534
  %v2562 = vpack.c.b16 %v2537, %v2536
  %v2563 = vpack.c.b16 %v2539, %v2538
  %v2564 = vpack.c.b16 %v2541, %v2540
  %v2565 = vpack.c.b16 %v2543, %v2542
  %v2566 = vpack.c.b16 %v2545, %v2544
  %v2567 = vpack.c.b16 %v2547, %v2546
  %v2568 = vpack.c.b16 %v2549, %v2548
  %v2569 = vpack.c.b16 %v2551, %v2550
  %v2570 = vpack.c.b16 %v2553, %v2552
  %v2571 = vpack.c.b16 %v2555, %v2554
  %2588 = vmatprep.subr.bf16.mxu0 0
  %2589 = vmatpush1.bf16.msra.mxu0 %v2556
  %2590 = vmatprep.subr.bf16.mxu0 0
  %2591 = vmatpush1.bf16.msra.mxu0 %v2557
  %2592 = vmatprep.subr.bf16.mxu0 0
  %2593 = vmatpush1.bf16.msra.mxu0 %v2558
  %2594 = vmatprep.subr.bf16.mxu0 0
  %2595 = vmatpush1.bf16.msra.mxu0 %v2559
  %2596 = vmatprep.subr.bf16.mxu0 0
  %2597 = vmatpush1.bf16.msra.mxu0 %v2560
  %2598 = vmatprep.subr.bf16.mxu0 0
  %2599 = vmatpush1.bf16.msra.mxu0 %v2561
  %2600 = vmatprep.subr.bf16.mxu0 0
  %2601 = vmatpush1.bf16.msra.mxu0 %v2562
  %2602 = vmatprep.subr.bf16.mxu0 0
  %2603 = vmatpush1.bf16.msra.mxu0 %v2563
  %2604 = vmatprep.subr.bf16.mxu0 0
  %2605 = vmatpush1.bf16.msra.mxu0 %v2564
  %2606 = vmatprep.subr.bf16.mxu0 0
  %2607 = vmatpush1.bf16.msra.mxu0 %v2565
  %2608 = vmatprep.subr.bf16.mxu0 0
  %2609 = vmatpush1.bf16.msra.mxu0 %v2566
  %2610 = vmatprep.subr.bf16.mxu0 0
  %2611 = vmatpush1.bf16.msra.mxu0 %v2567
  %2612 = vmatprep.subr.bf16.mxu0 0
  %2613 = vmatpush1.bf16.msra.mxu0 %v2568
  %2614 = vmatprep.subr.bf16.mxu0 0
  %2615 = vmatpush1.bf16.msra.mxu0 %v2569
  %2616 = vmatprep.subr.bf16.mxu0 0
  %2617 = vmatpush1.bf16.msra.mxu0 %v2570
  %2618 = vmatprep.subr.bf16.mxu0 0
  %2619 = vmatpush1.bf16.msra.mxu0 %v2571
  %2620 = vmatprep.mubr.bf16.mxu0 %v2452
  %2621 = vmatmul.mubr.bf16.gmra.mrb[0].mxu0 %v2451
  %v2622 = vpop.f32.mrb[0].mxu0
  %v2623 = vadd.f32 %v2490, %v2622
  %v2624 = vpop.f32.mrb[0].mxu0
  %v2625 = vpop.f32.mrb[0].mxu0
  %v2626 = vpop.f32.mrb[0].mxu0
  %2627 = vdwg.mxu0
  %v2628 = vmul.f32 %v51, 0.25
  %2630 = vrot.lane.b32.xlu0 %v2628, 126
  %v2631 = vpop.permute.xlu0 %2630
  %v2633 = vadd.f32 %v2623, %v2631
  %v2634 = vmul.f32 %v51, -0.5
  %v2635 = vmul.f32 %v2634, %v51
  %v2636 = vsub.f32 %v2635, -1.3862944
  %v2637 = vsub.f32 %v2636, 0.9189385
  %v2638 = vtanh.pop %v2633
  %vm2639 = vcmask 39952
  %v2640 = vsel %vm2639, %v2623, -inf
  %2641 = vmax.xlane.f32.xlu0 %v2640
  %v2642 = vpop.xlane.xlu0 %2641
  %v2643 = vsub.f32 %v2623, %v2642
  %v2644 = vmul.f32 %v2643, 1.442695
  %v2645 = vpow.pop %v2644
  %2647 = vrot.lane.b32.xlu0 %v2645, 126
  %v2648 = vpop.permute.xlu0 %2647
  %vm2650 = vcmask 23552
  %v2651 = vsel %vm2650, %v2648, 0.0
  %2652 = vadd.xlane.f32.xlu0 %v2651
  %v2653 = vpop.xlane.xlu0 %2652
  %v2654 = vlog2.pop %v2653
  %v2655 = vmul.f32 %v2654, 0.6931472
  %v2656 = vsub.f32 %v2643, %v2655
  %2657 = vrot.lane.b32.xlu0 %v51, 126
  %v2658 = vpop.permute.xlu0 %2657
  %v2660 = vadd.f32 %v2656, %v2658
  %v2661 = vsel %vm2639, %v2660, -inf
  %2662 = vmax.xlane.f32.xlu0 %v2661
  %v2663 = vpop.xlane.xlu0 %2662
  %v2664 = vlaneseq
  %v2665 = vand.u32 %v2664, 127
  %vm2666 = vcmp.ge.f32.partialorder %v2660, %v2663
  %2667 = vrot.lane.b32.xlu0 %v2665, 2
  %v2668 = vpop.permute.xlu0 %2667
  %v2669 = vsel %vm2666, %v2668, 3
  %v2670 = vsel %vm2639, %v2669, 2147483647
  %v2671 = vand.u32 %v2670, 65535
  %v2672 = vshra.s32 %v2670, 16
  %v2673 = vcvt.s32.f32 %v2671
  %v2674 = vcvt.s32.f32 %v2672
  %2675 = vmin.xlane.f32.xlu0 %v2674
  %v2676 = vpop.xlane.xlu0 %2675
  %vm2677 = vcmp.eq.f32.partialorder %v2674, %v2676
  %v2678 = vsel %vm2677, %v2673, inf
  %2679 = vmin.xlane.f32.xlu0 %v2678
  %v2680 = vpop.xlane.xlu0 %2679
  %v2681 = vcvt.f32.s32 %v2680
  %v2682 = vcvt.f32.s32 %v2676
  %v2683 = vshll.u32 %v2682, 16
  %v2684 = vadd.s32 %v2683, %v2681
  %vm2685 = vcmp.eq.s32.totalorder %v2665, %v2684
  %2687 = vrot.lane.b32.xlu0 %v2656, 126
  %v2688 = vpop.permute.xlu0 %2687
  %v2690 = vsel %vm2685, %v2688, 0.0
  %v2691 = vsel %vm2650, %v2690, 0.0
  %2692 = vadd.xlane.f32.xlu0 %v2691
  %v2693 = vpop.xlane.xlu0 %2692
  %v2694 = vsub.s32 %v2684, 1
  %v2695 = vcvt.s32.f32 %v2694
  %2697 = vrot.lane.b32.xlu0 %v2638, 4
  %v2698 = vpop.permute.xlu0 %2697
  %vm2700 = vcmask 7168
  %v2701 = vsel %vm2700, %v2695, %v2693
  %vm2702 = vcmask 15360
  %v2703 = vsel %vm2702, %v2701, %v2637
  %vm2704 = vcmask 31744
  %v2705 = vsel %vm2704, %v2703, %v2698
  %vm2706 = vcmask 48128
  %v2707 = vsel %vm2706, %v2705, 0.0
  %2708 = vst [vmem:[%s14] sm:$0xff] %v2707
  // Predicated region
  $region58: #{model_forward.1} parent=0 // pred_check
    _
  $region59: #{model_forward.1} parent=0 // pred_check_branch
    %2710 = sbr.rel (0) target = $region61
  $region60: #{model_forward.1} parent=0 // pred_region
    _
  $region61: #{model_forward.1} parent=0 // pred_fallthru
    _
  // Predicated region
  $region62: #{model_forward.1} parent=0 // pred_check
    _
  $region63: #{model_forward.1} parent=0 // pred_check_branch
    %2712 = sbr.rel (0) target = $region65
  $region64: #{model_forward.1} parent=0 // pred_region
    _
  $region65: #{model_forward.1} parent=0 // pred_fallthru
    _
  // Predicated region
  $region66: #{model_forward.1} parent=0 // pred_check
    _
  $region67: #{model_forward.1} parent=0 // pred_check_branch
    %2714 = sbr.rel (0) target = $region69
  $region68: #{model_forward.1} parent=0 // pred_region
    _
  $region69: #{model_forward.1} parent=0 // pred_fallthru
    _
  // Predicated region
  $region70: #{model_forward.1} parent=0 // pred_check
    _
  $region71: #{model_forward.1} parent=0 // pred_check_branch
    %2716 = sbr.rel (0) target = $region73
  $region72: #{model_forward.1} parent=0 // pred_region
    _
  $region73: #{model_forward.1} parent=0 // pred_fallthru
    _
  // Predicated region
  $region74: #{model_forward.1} parent=0 // pred_check
    _
  $region75: #{model_forward.1} parent=0 // pred_check_branch
    %2718 = sbr.rel (0) target = $region77
  $region76: #{model_forward.1} parent=0 // pred_region
    _
  $region77: #{model_forward.1} parent=0 // pred_fallthru
    _
  // Predicated region
  $region78: #{model_forward.1} parent=0 // pred_check
    _
  $region79: #{model_forward.1} parent=0 // pred_check_branch
    %2720 = sbr.rel (0) target = $region81
  $region80: #{model_forward.1} parent=0 // pred_region
    _
  $region81: #{model_forward.1} parent=0 // pred_fallthru
    _

</llo_original>
